<compile_context>
chip_gen: v6e
topology: v6e:2x2x1
jax: 0.10.0
libtpu: 0.0.40
codegen_flags: <defaults>
</compile_context>

<pallas_src>
from functools import partial

import jax
import jax.numpy as jnp
from jax.experimental import pallas as pl
from jax.experimental.pallas import tpu as pltpu


def transformer_block_kernel(x_ref,
                             ln1_scale_ref, ln1_shift_ref,
                             wqkv_ref, wo_ref, bo_ref,
                             ln2_scale_ref, ln2_shift_ref,
                             w1_ref, b1_ref, w2_ref, b2_ref,
                             o_ref, *, num_heads, matmul_dtype):
    f32 = jnp.float32
    x = x_ref[...].astype(f32)                            # (T, D): one sequence per grid step
    T, D = x.shape
    H = num_heads
    hd = D // H

    def layernorm(v, scale_ref, shift_ref):
        mean = jnp.mean(v, axis=-1, keepdims=True)
        cent = v - mean
        var = jnp.mean(cent * cent, axis=-1, keepdims=True)      # unbiased=False
        inv = jax.lax.rsqrt(var + 1e-5)                          # EUP rsqrt
        return scale_ref[...].astype(f32) * (cent * inv) + shift_ref[...].astype(f32)

    def mm(a, b):                                          # 2-D matmul, f32 accumulation
        return jnp.dot(a.astype(matmul_dtype), b.astype(matmul_dtype),
                       preferred_element_type=f32)

    def bmm(spec, a, b):                                   # head-batched matmul, f32 accumulation
        return jnp.einsum(spec, a.astype(matmul_dtype), b.astype(matmul_dtype),
                          preferred_element_type=f32)

    # ---- norm1 ----
    ln1 = layernorm(x, ln1_scale_ref, ln1_shift_ref)                  # (T, D)

    # ---- fused QKV projection: one (T,D)@(D,3D) MXU matmul ----
    qkv = mm(ln1, wqkv_ref[...])                                      # (T, 3D); 1/sqrt(hd) folded into Wq
    q = qkv[:, :D].reshape(T, H, hd).transpose(1, 0, 2)               # (H, T, hd)
    k = qkv[:, D:2 * D].reshape(T, H, hd).transpose(1, 0, 2)
    v = qkv[:, 2 * D:].reshape(T, H, hd).transpose(1, 0, 2)

    # ---- causal self-attention (per-sequence, all heads batched) ----
    scores = bmm('hqd,hkd->hqk', q, k)                                # (H, T, T)
    row = jax.lax.broadcasted_iota(jnp.int32, (T, T), 0)
    col = jax.lax.broadcasted_iota(jnp.int32, (T, T), 1)
    scores = jnp.where((col <= row)[None, :, :], scores, -1e30)       # in-kernel causal mask
    scores = scores - jnp.max(scores, axis=-1, keepdims=True)
    p = jnp.exp(scores)
    attn = p * pl.reciprocal(jnp.sum(p, axis=-1, keepdims=True), approx=True)
    ctx = bmm('hqk,hkd->hqd', attn, v)                                # (H, T, hd)
    # TODO(synk): for long context lengths replace this dense (T, T) score path with a
    # KV-tiled online-softmax (flash) loop to bound VMEM (most important on v7x's 64 MiB).

    # ---- merge heads and single (T,D)@(D,D) output projection ----
    ctx = ctx.transpose(1, 0, 2).reshape(T, D)
    attn_out = mm(ctx, wo_ref[...]) + bo_ref[...].astype(f32)

    # ---- residual 1 (drop_shortcut is identity: eval / p=0.0) ----
    x1 = x + attn_out

    # ---- norm2 + feed-forward (Linear -> GELU(tanh approx) -> Linear) ----
    ln2 = layernorm(x1, ln2_scale_ref, ln2_shift_ref)
    h1 = mm(ln2, w1_ref[...]) + b1_ref[...].astype(f32)               # (T, 4D)
    c = 0.7978845608028654                                            # sqrt(2/pi)
    h1 = 0.5 * h1 * (1.0 + jnp.tanh(c * (h1 + 0.044715 * h1 * h1 * h1)))
    ff = mm(h1, w2_ref[...]) + b2_ref[...].astype(f32)

    # ---- residual 2 ----
    o_ref[...] = (x1 + ff).astype(o_ref.dtype)


def preprocess_params(params, num_heads, matmul_dtype=jnp.bfloat16):
    """One-time parameter re-layout (hoisted out of the per-call forward path)."""
    D = params["wq"].shape[0]
    hd = D // num_heads
    inv_scale = 1.0 / (hd ** 0.5)
    f32 = jnp.float32
    return {
        "ln1_scale": params["ln1_scale"].reshape(1, D).astype(f32),
        "ln1_shift": params["ln1_shift"].reshape(1, D).astype(f32),
        # fused QKV weight; 1/sqrt(head_dim) folded into the query block
        "wqkv": jnp.concatenate(
            [params["wq"] * inv_scale, params["wk"], params["wv"]], axis=1
        ).astype(matmul_dtype),
        "wo": params["wo"].astype(matmul_dtype),
        "bo": params["bo"].reshape(1, D).astype(f32),
        "ln2_scale": params["ln2_scale"].reshape(1, D).astype(f32),
        "ln2_shift": params["ln2_shift"].reshape(1, D).astype(f32),
        "w1": params["w1"].astype(matmul_dtype),
        "b1": params["b1"].reshape(1, -1).astype(f32),
        "w2": params["w2"].astype(matmul_dtype),
        "b2": params["b2"].reshape(1, D).astype(f32),
    }


def transformer_block(x, prep, num_heads, *, matmul_dtype=jnp.bfloat16):
    B, T, D = x.shape
    assert D % num_heads == 0
    D4 = prep["w1"].shape[1]

    x = x.astype(jnp.float32)

    args = (x,
            prep["ln1_scale"], prep["ln1_shift"],
            prep["wqkv"], prep["wo"], prep["bo"],
            prep["ln2_scale"], prep["ln2_shift"],
            prep["w1"], prep["b1"], prep["w2"], prep["b2"])

    def resident(a):
        # Weights/biases: full block + constant index -> fetched once, VMEM-resident
        # across the batch grid.
        # TODO(synk): add pipeline_mode=pl.Buffered(1) on these specs to drop the unused
        # second buffer (halves resident weight VMEM) once sizes make it matter.
        shape = tuple(a.shape)
        n = len(shape)
        return pl.BlockSpec(shape, lambda b, n=n: (0,) * n)

    in_specs = ([pl.BlockSpec((None, T, D), lambda b: (b, 0, 0))]
                + [resident(a) for a in args[1:]])
    out_spec = pl.BlockSpec((None, T, D), lambda b: (b, 0, 0))

    # Cost estimate consistent with per-sequence attention (no cross-sequence waste).
    flops = int(B * T * 24 * D * D + 4 * B * T * T * D)
    transcendentals = int(B * (num_heads * T * T + T * D4 + num_heads * T + 2 * T))
    bytes_accessed = int(sum(int(a.size) * a.dtype.itemsize for a in args)
                         + B * T * D * 4)

    out = pl.pallas_call(
        partial(transformer_block_kernel, num_heads=num_heads,
                matmul_dtype=matmul_dtype),
        out_shape=jax.ShapeDtypeStruct((B, T, D), jnp.float32),
        grid=(B,),
        in_specs=in_specs,
        out_specs=out_spec,
        compiler_params=pltpu.CompilerParams(
            # Sequences are independent -> megacore sharding across v7x's 2 TCs.
            dimension_semantics=("parallel",),
            vmem_limit_bytes=32 * 1024 * 1024),
        cost_estimate=pl.CostEstimate(flops=flops,
                                      transcendentals=transcendentals,
                                      bytes_accessed=bytes_accessed),
    )(*args)
    return out


def reference_block(x, params, num_heads):
    """Pure-JAX reference with identical math (for a correctness check)."""
    B, T, D = x.shape
    hd = D // num_heads
    eps = 1e-5

    def ln(v, s, sh):
        m = jnp.mean(v, -1, keepdims=True)
        var = jnp.mean((v - m) ** 2, -1, keepdims=True)
        return s * ((v - m) / jnp.sqrt(var + eps)) + sh

    h = ln(x, params["ln1_scale"], params["ln1_shift"])
    q = h @ params["wq"]; k = h @ params["wk"]; v = h @ params["wv"]
    q = q.reshape(B, T, num_heads, hd).transpose(0, 2, 1, 3)
    k = k.reshape(B, T, num_heads, hd).transpose(0, 2, 1, 3)
    v = v.reshape(B, T, num_heads, hd).transpose(0, 2, 1, 3)
    scores = q @ k.transpose(0, 1, 3, 2)
    mask = jnp.triu(jnp.ones((T, T), bool), 1)
    scores = jnp.where(mask, -jnp.inf, scores) / jnp.sqrt(jnp.float32(hd))
    attn = jax.nn.softmax(scores, axis=-1)
    ctx = (attn @ v).transpose(0, 2, 1, 3).reshape(B, T, D)
    x1 = x + (ctx @ params["wo"] + params["bo"])
    h2 = ln(x1, params["ln2_scale"], params["ln2_shift"])
    g = h2 @ params["w1"] + params["b1"]
    g = 0.5 * g * (1.0 + jnp.tanh(jnp.sqrt(2.0 / jnp.pi) * (g + 0.044715 * g ** 3)))
    return x1 + (g @ params["w2"] + params["b2"])


if __name__ == "__main__":
    # cfg: emb_dim=32, context_length=8, n_heads=4, drop_rate=0.0, qkv_bias=False
    B, T, D, H = 2, 8, 32, 4
    key = jax.random.PRNGKey(0)
    ks = jax.random.split(key, 8)

    params = {
        "ln1_scale": jnp.ones((1, D), jnp.float32),
        "ln1_shift": jnp.zeros((1, D), jnp.float32),
        "wq": 0.02 * jax.random.normal(ks[0], (D, D), jnp.float32),
        "wk": 0.02 * jax.random.normal(ks[1], (D, D), jnp.float32),
        "wv": 0.02 * jax.random.normal(ks[2], (D, D), jnp.float32),
        "wo": 0.02 * jax.random.normal(ks[3], (D, D), jnp.float32),
        "bo": 0.01 * jax.random.normal(ks[4], (1, D), jnp.float32),
        "ln2_scale": jnp.ones((1, D), jnp.float32),
        "ln2_shift": jnp.zeros((1, D), jnp.float32),
        "w1": 0.02 * jax.random.normal(ks[5], (D, 4 * D), jnp.float32),
        "b1": jnp.zeros((1, 4 * D), jnp.float32),
        "w2": 0.02 * jax.random.normal(ks[6], (4 * D, D), jnp.float32),
        "b2": jnp.zeros((1, D), jnp.float32),
    }
    x = jax.random.normal(ks[7], (B, T, D), jnp.float32)

    ref = reference_block(x, params, num_heads=H)

    # f32 MXU operands (exact-ish path)
    prep_f32 = preprocess_params(params, H, matmul_dtype=jnp.float32)
    out_f32 = jax.block_until_ready(
        transformer_block(x, prep_f32, H, matmul_dtype=jnp.float32))
    assert out_f32.shape == (B, T, D)
    assert jnp.allclose(out_f32, ref, atol=1e-2, rtol=1e-2), "f32 kernel mismatch vs reference"

    # bf16 MXU operands, f32 accumulation (v6e/v7x fast path, default) -- looser tolerance
    prep_bf16 = preprocess_params(params, H, matmul_dtype=jnp.bfloat16)
    out_bf16 = jax.block_until_ready(
        transformer_block(x, prep_bf16, H, matmul_dtype=jnp.bfloat16))
    assert out_bf16.shape == (B, T, D)
    assert jnp.allclose(out_bf16, ref, atol=5e-2, rtol=5e-2), "bf16 kernel mismatch vs reference"

    print("KERNEL_OK")
</pallas_src>

<mosaic_0001>
module attributes {stable_mosaic.version = 11 : i64} {
  func.func @transformer_block_kernel(%arg0: i32, %arg1: memref<1x8x32xf32, #tpu.memory_space<vmem>>, %arg2: memref<1x32xf32, #tpu.memory_space<vmem>>, %arg3: memref<1x32xf32, #tpu.memory_space<vmem>>, %arg4: memref<32x96xf32, #tpu.memory_space<vmem>>, %arg5: memref<32x32xf32, #tpu.memory_space<vmem>>, %arg6: memref<1x32xf32, #tpu.memory_space<vmem>>, %arg7: memref<1x32xf32, #tpu.memory_space<vmem>>, %arg8: memref<1x32xf32, #tpu.memory_space<vmem>>, %arg9: memref<32x128xf32, #tpu.memory_space<vmem>>, %arg10: memref<1x128xf32, #tpu.memory_space<vmem>>, %arg11: memref<128x32xf32, #tpu.memory_space<vmem>>, %arg12: memref<1x32xf32, #tpu.memory_space<vmem>>, %arg13: memref<1x8x32xf32, #tpu.memory_space<vmem>>) attributes {dimension_semantics = [#tpu.dimension_semantics<parallel>], iteration_bounds = array<i64: 2>, scalar_prefetch = 0 : i64, scratch_operands = 0 : i64, tpu.core_type = #tpu.core_type<tc>, window_params = [{transform_indices = @transform_0, window_bounds = array<i64: 1, 8, 32>}, {pipeline_mode = #tpu.pipeline_mode<synchronous>, transform_indices = @transform_1, window_bounds = array<i64: 1, 32>}, {pipeline_mode = #tpu.pipeline_mode<synchronous>, transform_indices = @transform_2, window_bounds = array<i64: 1, 32>}, {pipeline_mode = #tpu.pipeline_mode<synchronous>, transform_indices = @transform_3, window_bounds = array<i64: 32, 96>}, {pipeline_mode = #tpu.pipeline_mode<synchronous>, transform_indices = @transform_4, window_bounds = array<i64: 32, 32>}, {pipeline_mode = #tpu.pipeline_mode<synchronous>, transform_indices = @transform_5, window_bounds = array<i64: 1, 32>}, {pipeline_mode = #tpu.pipeline_mode<synchronous>, transform_indices = @transform_6, window_bounds = array<i64: 1, 32>}, {pipeline_mode = #tpu.pipeline_mode<synchronous>, transform_indices = @transform_7, window_bounds = array<i64: 1, 32>}, {pipeline_mode = #tpu.pipeline_mode<synchronous>, transform_indices = @transform_8, window_bounds = array<i64: 32, 128>}, {pipeline_mode = #tpu.pipeline_mode<synchronous>, transform_indices = @transform_9, window_bounds = array<i64: 1, 128>}, {pipeline_mode = #tpu.pipeline_mode<synchronous>, transform_indices = @transform_10, window_bounds = array<i64: 128, 32>}, {pipeline_mode = #tpu.pipeline_mode<synchronous>, transform_indices = @transform_11, window_bounds = array<i64: 1, 32>}, {transform_indices = @transform_12, window_bounds = array<i64: 1, 8, 32>}]} {
    %c0 = arith.constant 0 : index
    %c0_0 = arith.constant 0 : index
    %c0_1 = arith.constant 0 : index
    %0 = vector.load %arg1[%c0, %c0_0, %c0_1] : memref<1x8x32xf32, #tpu.memory_space<vmem>>, vector<1x8x32xf32>
    %1 = vector.shape_cast %0 : vector<1x8x32xf32> to vector<8x32xf32>
    %cst = arith.constant dense<0.000000e+00> : vector<8xf32>
    %2 = vector.multi_reduction <add>, %1, %cst [1] : vector<8x32xf32> to vector<8xf32>
    %3 = vector.shape_cast %2 : vector<8xf32> to vector<8x1xf32>
    %cst_2 = arith.constant 3.200000e+01 : f32
    %4 = vector.broadcast %cst_2 : f32 to vector<8x1xf32>
    %5 = arith.divf %3, %4 : vector<8x1xf32>
    %6 = vector.broadcast %5 : vector<8x1xf32> to vector<8x32xf32>
    %7 = arith.subf %1, %6 : vector<8x32xf32>
    %8 = arith.mulf %7, %7 : vector<8x32xf32>
    %cst_3 = arith.constant dense<0.000000e+00> : vector<8xf32>
    %9 = vector.multi_reduction <add>, %8, %cst_3 [1] : vector<8x32xf32> to vector<8xf32>
    %10 = vector.shape_cast %9 : vector<8xf32> to vector<8x1xf32>
    %cst_4 = arith.constant 3.200000e+01 : f32
    %11 = vector.broadcast %cst_4 : f32 to vector<8x1xf32>
    %12 = arith.divf %10, %11 : vector<8x1xf32>
    %cst_5 = arith.constant 9.99999974E-6 : f32
    %13 = vector.broadcast %cst_5 : f32 to vector<8x1xf32>
    %14 = arith.addf %12, %13 : vector<8x1xf32>
    %15 = math.rsqrt %14 : vector<8x1xf32>
    %c0_6 = arith.constant 0 : index
    %c0_7 = arith.constant 0 : index
    %16 = vector.load %arg2[%c0_6, %c0_7] : memref<1x32xf32, #tpu.memory_space<vmem>>, vector<1x32xf32>
    %17 = vector.broadcast %15 : vector<8x1xf32> to vector<8x32xf32>
    %18 = arith.mulf %7, %17 : vector<8x32xf32>
    %19 = vector.broadcast %16 : vector<1x32xf32> to vector<8x32xf32>
    %20 = arith.mulf %19, %18 : vector<8x32xf32>
    %c0_8 = arith.constant 0 : index
    %c0_9 = arith.constant 0 : index
    %21 = vector.load %arg3[%c0_8, %c0_9] : memref<1x32xf32, #tpu.memory_space<vmem>>, vector<1x32xf32>
    %22 = vector.broadcast %21 : vector<1x32xf32> to vector<8x32xf32>
    %23 = arith.addf %20, %22 : vector<8x32xf32>
    %c0_10 = arith.constant 0 : index
    %c0_11 = arith.constant 0 : index
    %24 = vector.load %arg4[%c0_10, %c0_11] : memref<32x96xf32, #tpu.memory_space<vmem>>, vector<32x96xf32>
    %cst_12 = arith.constant dense<0.000000e+00> : vector<8x96xf32>
    %25 = tpu.matmul %23, %24, %cst_12 {dimension_numbers = #tpu.dot_dimension_numbers<[1], [0], [0], [1], [0, 0, 1, 1], [], []>} : vector<8x32xf32>, vector<32x96xf32>, vector<8x96xf32> -> vector<8x96xf32>
    %26 = vector.extract_strided_slice %25 {offsets = [0, 0], sizes = [8, 32], strides = [1, 1]} : vector<8x96xf32> to vector<8x32xf32>
    %27 = vector.shape_cast %26 : vector<8x32xf32> to vector<8x4x8xf32>
    %28 = tpu.transpose %27, [1, 0, 2] : vector<8x4x8xf32> -> vector<4x8x8xf32>
    %29 = vector.extract_strided_slice %25 {offsets = [0, 32], sizes = [8, 32], strides = [1, 1]} : vector<8x96xf32> to vector<8x32xf32>
    %30 = vector.shape_cast %29 : vector<8x32xf32> to vector<8x4x8xf32>
    %31 = tpu.transpose %30, [1, 0, 2] : vector<8x4x8xf32> -> vector<4x8x8xf32>
    %32 = vector.extract_strided_slice %25 {offsets = [0, 64], sizes = [8, 32], strides = [1, 1]} : vector<8x96xf32> to vector<8x32xf32>
    %33 = vector.shape_cast %32 : vector<8x32xf32> to vector<8x4x8xf32>
    %34 = tpu.transpose %33, [1, 0, 2] : vector<8x4x8xf32> -> vector<4x8x8xf32>
    "tpu.trace_start"() <{level = 10 : i32, message = "hqd,hkd->hqk"}> : () -> ()
    %cst_13 = arith.constant dense<0.000000e+00> : vector<4x8x8xf32>
    %35 = tpu.matmul %28, %31, %cst_13 {dimension_numbers = #tpu.dot_dimension_numbers<[2], [2], [1], [1], [0, 0, 0, 1, 1, 1], [0], [0]>} : vector<4x8x8xf32>, vector<4x8x8xf32>, vector<4x8x8xf32> -> vector<4x8x8xf32>
    "tpu.trace_stop"() : () -> ()
    %36 = tpu.iota {dimensions = array<i32: 0>} : vector<8x8xi32>
    %37 = tpu.iota {dimensions = array<i32: 1>} : vector<8x8xi32>
    %38 = arith.cmpi sle, %37, %36 : vector<8x8xi32>
    %39 = vector.shape_cast %38 : vector<8x8xi1> to vector<1x8x8xi1>
    %cst_14 = arith.constant -1.000000e+30 : f32
    %40 = vector.shape_cast %39 : vector<1x8x8xi1> to vector<1x8x8xi1>
    %41 = vector.broadcast %40 : vector<1x8x8xi1> to vector<4x8x8xi1>
    %42 = vector.broadcast %cst_14 : f32 to vector<4x8x8xf32>
    %43 = arith.select %41, %35, %42 : vector<4x8x8xi1>, vector<4x8x8xf32>
    %cst_15 = arith.constant dense<0xFF800000> : vector<4x8xf32>
    %44 = vector.multi_reduction <maximumf>, %43, %cst_15 [2] : vector<4x8x8xf32> to vector<4x8xf32>
    %45 = vector.shape_cast %44 : vector<4x8xf32> to vector<4x8x1xf32>
    %46 = vector.broadcast %45 : vector<4x8x1xf32> to vector<4x8x8xf32>
    %47 = arith.subf %43, %46 : vector<4x8x8xf32>
    %48 = math.exp %47 : vector<4x8x8xf32>
    %cst_16 = arith.constant dense<0.000000e+00> : vector<4x8xf32>
    %49 = vector.multi_reduction <add>, %48, %cst_16 [2] : vector<4x8x8xf32> to vector<4x8xf32>
    %50 = vector.shape_cast %49 : vector<4x8xf32> to vector<4x8x1xf32>
    %51 = tpu.reciprocal %50 {approx = true} : vector<4x8x1xf32> -> vector<4x8x1xf32>
    %52 = vector.broadcast %51 : vector<4x8x1xf32> to vector<4x8x8xf32>
    %53 = arith.mulf %48, %52 : vector<4x8x8xf32>
    "tpu.trace_start"() <{level = 10 : i32, message = "hqk,hkd->hqd"}> : () -> ()
    %cst_17 = arith.constant dense<0.000000e+00> : vector<4x8x8xf32>
    %54 = tpu.matmul %53, %34, %cst_17 {dimension_numbers = #tpu.dot_dimension_numbers<[2], [1], [1], [2], [0, 0, 0, 1, 1, 2], [0], [0]>} : vector<4x8x8xf32>, vector<4x8x8xf32>, vector<4x8x8xf32> -> vector<4x8x8xf32>
    "tpu.trace_stop"() : () -> ()
    %55 = tpu.transpose %54, [1, 0, 2] : vector<4x8x8xf32> -> vector<8x4x8xf32>
    %56 = vector.shape_cast %55 : vector<8x4x8xf32> to vector<8x32xf32>
    %c0_18 = arith.constant 0 : index
    %c0_19 = arith.constant 0 : index
    %57 = vector.load %arg5[%c0_18, %c0_19] : memref<32x32xf32, #tpu.memory_space<vmem>>, vector<32x32xf32>
    %cst_20 = arith.constant dense<0.000000e+00> : vector<8x32xf32>
    %58 = tpu.matmul %56, %57, %cst_20 {dimension_numbers = #tpu.dot_dimension_numbers<[1], [0], [0], [1], [0, 0, 1, 1], [], []>} : vector<8x32xf32>, vector<32x32xf32>, vector<8x32xf32> -> vector<8x32xf32>
    %c0_21 = arith.constant 0 : index
    %c0_22 = arith.constant 0 : index
    %59 = vector.load %arg6[%c0_21, %c0_22] : memref<1x32xf32, #tpu.memory_space<vmem>>, vector<1x32xf32>
    %60 = vector.broadcast %59 : vector<1x32xf32> to vector<8x32xf32>
    %61 = arith.addf %58, %60 : vector<8x32xf32>
    %62 = arith.addf %1, %61 : vector<8x32xf32>
    %cst_23 = arith.constant dense<0.000000e+00> : vector<8xf32>
    %63 = vector.multi_reduction <add>, %62, %cst_23 [1] : vector<8x32xf32> to vector<8xf32>
    %64 = vector.shape_cast %63 : vector<8xf32> to vector<8x1xf32>
    %cst_24 = arith.constant 3.200000e+01 : f32
    %65 = vector.broadcast %cst_24 : f32 to vector<8x1xf32>
    %66 = arith.divf %64, %65 : vector<8x1xf32>
    %67 = vector.broadcast %66 : vector<8x1xf32> to vector<8x32xf32>
    %68 = arith.subf %62, %67 : vector<8x32xf32>
    %69 = arith.mulf %68, %68 : vector<8x32xf32>
    %cst_25 = arith.constant dense<0.000000e+00> : vector<8xf32>
    %70 = vector.multi_reduction <add>, %69, %cst_25 [1] : vector<8x32xf32> to vector<8xf32>
    %71 = vector.shape_cast %70 : vector<8xf32> to vector<8x1xf32>
    %cst_26 = arith.constant 3.200000e+01 : f32
    %72 = vector.broadcast %cst_26 : f32 to vector<8x1xf32>
    %73 = arith.divf %71, %72 : vector<8x1xf32>
    %cst_27 = arith.constant 9.99999974E-6 : f32
    %74 = vector.broadcast %cst_27 : f32 to vector<8x1xf32>
    %75 = arith.addf %73, %74 : vector<8x1xf32>
    %76 = math.rsqrt %75 : vector<8x1xf32>
    %c0_28 = arith.constant 0 : index
    %c0_29 = arith.constant 0 : index
    %77 = vector.load %arg7[%c0_28, %c0_29] : memref<1x32xf32, #tpu.memory_space<vmem>>, vector<1x32xf32>
    %78 = vector.broadcast %76 : vector<8x1xf32> to vector<8x32xf32>
    %79 = arith.mulf %68, %78 : vector<8x32xf32>
    %80 = vector.broadcast %77 : vector<1x32xf32> to vector<8x32xf32>
    %81 = arith.mulf %80, %79 : vector<8x32xf32>
    %c0_30 = arith.constant 0 : index
    %c0_31 = arith.constant 0 : index
    %82 = vector.load %arg8[%c0_30, %c0_31] : memref<1x32xf32, #tpu.memory_space<vmem>>, vector<1x32xf32>
    %83 = vector.broadcast %82 : vector<1x32xf32> to vector<8x32xf32>
    %84 = arith.addf %81, %83 : vector<8x32xf32>
    %c0_32 = arith.constant 0 : index
    %c0_33 = arith.constant 0 : index
    %85 = vector.load %arg9[%c0_32, %c0_33] : memref<32x128xf32, #tpu.memory_space<vmem>>, vector<32x128xf32>
    %cst_34 = arith.constant dense<0.000000e+00> : vector<8x128xf32>
    %86 = tpu.matmul %84, %85, %cst_34 {dimension_numbers = #tpu.dot_dimension_numbers<[1], [0], [0], [1], [0, 0, 1, 1], [], []>} : vector<8x32xf32>, vector<32x128xf32>, vector<8x128xf32> -> vector<8x128xf32>
    %c0_35 = arith.constant 0 : index
    %c0_36 = arith.constant 0 : index
    %87 = vector.load %arg10[%c0_35, %c0_36] : memref<1x128xf32, #tpu.memory_space<vmem>>, vector<1x128xf32>
    %88 = vector.broadcast %87 : vector<1x128xf32> to vector<8x128xf32>
    %89 = arith.addf %86, %88 : vector<8x128xf32>
    %cst_37 = arith.constant 5.000000e-01 : f32
    %90 = vector.broadcast %cst_37 : f32 to vector<8x128xf32>
    %91 = arith.mulf %90, %89 : vector<8x128xf32>
    %cst_38 = arith.constant 4.471500e-02 : f32
    %92 = vector.broadcast %cst_38 : f32 to vector<8x128xf32>
    %93 = arith.mulf %92, %89 : vector<8x128xf32>
    %94 = arith.mulf %93, %89 : vector<8x128xf32>
    %95 = arith.mulf %94, %89 : vector<8x128xf32>
    %96 = arith.addf %89, %95 : vector<8x128xf32>
    %cst_39 = arith.constant 0.797884583 : f32
    %97 = vector.broadcast %cst_39 : f32 to vector<8x128xf32>
    %98 = arith.mulf %97, %96 : vector<8x128xf32>
    %99 = math.tanh %98 : vector<8x128xf32>
    %cst_40 = arith.constant 1.000000e+00 : f32
    %100 = vector.broadcast %cst_40 : f32 to vector<8x128xf32>
    %101 = arith.addf %100, %99 : vector<8x128xf32>
    %102 = arith.mulf %91, %101 : vector<8x128xf32>
    %c0_41 = arith.constant 0 : index
    %c0_42 = arith.constant 0 : index
    %103 = vector.load %arg11[%c0_41, %c0_42] : memref<128x32xf32, #tpu.memory_space<vmem>>, vector<128x32xf32>
    %cst_43 = arith.constant dense<0.000000e+00> : vector<8x32xf32>
    %104 = tpu.matmul %102, %103, %cst_43 {dimension_numbers = #tpu.dot_dimension_numbers<[1], [0], [0], [1], [0, 0, 1, 1], [], []>} : vector<8x128xf32>, vector<128x32xf32>, vector<8x32xf32> -> vector<8x32xf32>
    %c0_44 = arith.constant 0 : index
    %c0_45 = arith.constant 0 : index
    %105 = vector.load %arg12[%c0_44, %c0_45] : memref<1x32xf32, #tpu.memory_space<vmem>>, vector<1x32xf32>
    %106 = vector.broadcast %105 : vector<1x32xf32> to vector<8x32xf32>
    %107 = arith.addf %104, %106 : vector<8x32xf32>
    %108 = arith.addf %62, %107 : vector<8x32xf32>
    %c0_46 = arith.constant 0 : index
    %c0_47 = arith.constant 0 : index
    %c0_48 = arith.constant 0 : index
    %109 = vector.load %arg13[%c0_46, %c0_47, %c0_48] : memref<1x8x32xf32, #tpu.memory_space<vmem>>, vector<1x8x32xf32>
    %110 = vector.shape_cast %109 : vector<1x8x32xf32> to vector<8x32xf32>
    %111 = vector.shape_cast %108 : vector<8x32xf32> to vector<1x8x32xf32>
    tpu.vector_store %arg13[%c0_46, %c0_47, %c0_48], %111 {strides = array<i32>} : memref<1x8x32xf32, #tpu.memory_space<vmem>>, vector<1x8x32xf32>,
    return
  }
  func.func @transform_0(%arg0: i32) -> (i32, i32, i32) {
    %c0_i32 = arith.constant 0 : i32
    %c0_i32_0 = arith.constant 0 : i32
    %c0_i32_1 = arith.constant 0 : i32
    return %arg0, %c0_i32, %c0_i32_0 : i32, i32, i32
  }
  func.func @transform_1(%arg0: i32) -> (i32, i32) {
    %c0_i32 = arith.constant 0 : i32
    %c0_i32_0 = arith.constant 0 : i32
    %c0_i32_1 = arith.constant 0 : i32
    return %c0_i32, %c0_i32_0 : i32, i32
  }
  func.func @transform_2(%arg0: i32) -> (i32, i32) {
    %c0_i32 = arith.constant 0 : i32
    %c0_i32_0 = arith.constant 0 : i32
    %c0_i32_1 = arith.constant 0 : i32
    return %c0_i32, %c0_i32_0 : i32, i32
  }
  func.func @transform_3(%arg0: i32) -> (i32, i32) {
    %c0_i32 = arith.constant 0 : i32
    %c0_i32_0 = arith.constant 0 : i32
    %c0_i32_1 = arith.constant 0 : i32
    return %c0_i32, %c0_i32_0 : i32, i32
  }
  func.func @transform_4(%arg0: i32) -> (i32, i32) {
    %c0_i32 = arith.constant 0 : i32
    %c0_i32_0 = arith.constant 0 : i32
    %c0_i32_1 = arith.constant 0 : i32
    return %c0_i32, %c0_i32_0 : i32, i32
  }
  func.func @transform_5(%arg0: i32) -> (i32, i32) {
    %c0_i32 = arith.constant 0 : i32
    %c0_i32_0 = arith.constant 0 : i32
    %c0_i32_1 = arith.constant 0 : i32
    return %c0_i32, %c0_i32_0 : i32, i32
  }
  func.func @transform_6(%arg0: i32) -> (i32, i32) {
    %c0_i32 = arith.constant 0 : i32
    %c0_i32_0 = arith.constant 0 : i32
    %c0_i32_1 = arith.constant 0 : i32
    return %c0_i32, %c0_i32_0 : i32, i32
  }
  func.func @transform_7(%arg0: i32) -> (i32, i32) {
    %c0_i32 = arith.constant 0 : i32
    %c0_i32_0 = arith.constant 0 : i32
    %c0_i32_1 = arith.constant 0 : i32
    return %c0_i32, %c0_i32_0 : i32, i32
  }
  func.func @transform_8(%arg0: i32) -> (i32, i32) {
    %c0_i32 = arith.constant 0 : i32
    %c0_i32_0 = arith.constant 0 : i32
    %c0_i32_1 = arith.constant 0 : i32
    return %c0_i32, %c0_i32_0 : i32, i32
  }
  func.func @transform_9(%arg0: i32) -> (i32, i32) {
    %c0_i32 = arith.constant 0 : i32
    %c0_i32_0 = arith.constant 0 : i32
    %c0_i32_1 = arith.constant 0 : i32
    return %c0_i32, %c0_i32_0 : i32, i32
  }
  func.func @transform_10(%arg0: i32) -> (i32, i32) {
    %c0_i32 = arith.constant 0 : i32
    %c0_i32_0 = arith.constant 0 : i32
    %c0_i32_1 = arith.constant 0 : i32
    return %c0_i32, %c0_i32_0 : i32, i32
  }
  func.func @transform_11(%arg0: i32) -> (i32, i32) {
    %c0_i32 = arith.constant 0 : i32
    %c0_i32_0 = arith.constant 0 : i32
    %c0_i32_1 = arith.constant 0 : i32
    return %c0_i32, %c0_i32_0 : i32, i32
  }
  func.func @transform_12(%arg0: i32) -> (i32, i32, i32) {
    %c0_i32 = arith.constant 0 : i32
    %c0_i32_0 = arith.constant 0 : i32
    %c0_i32_1 = arith.constant 0 : i32
    return %arg0, %c0_i32, %c0_i32_0 : i32, i32, i32
  }
}

</mosaic_0001>

<llo_original>
// kernel: tpu_custom_call.1
$region0: #{tpu_custom_call.1}
  #allocation0 [shape = 'u32[]', space=smem, size = 0x4, offset = 0x4, fixed_abs, tag = 'smem constant byte address 0x4 - core index']
  #allocation1 [shape = 'u32[144,128]{1,0:T(1,128)}', space=vmem, size = 0x12000, scoped, tag = 'internal scratch']
  %s0 = inlined_call_operand.vmem [shape: f32[2,8,32], index: 0, kind: input, shape index: {}]
  %s1 = inlined_call_operand.vmem [shape: f32[1,32], index: 1, kind: input, shape index: {}]
  %s2 = inlined_call_operand.vmem [shape: f32[1,32], index: 2, kind: input, shape index: {}]
  %s3 = inlined_call_operand.vmem [shape: f32[32,96], index: 3, kind: input, shape index: {}]
  %s4 = inlined_call_operand.vmem [shape: f32[32,32], index: 4, kind: input, shape index: {}]
  %s5 = inlined_call_operand.vmem [shape: f32[1,32], index: 5, kind: input, shape index: {}]
  %s6 = inlined_call_operand.vmem [shape: f32[1,32], index: 6, kind: input, shape index: {}]
  %s7 = inlined_call_operand.vmem [shape: f32[1,32], index: 7, kind: input, shape index: {}]
  %s8 = inlined_call_operand.vmem [shape: f32[32,128], index: 8, kind: input, shape index: {}]
  %s9 = inlined_call_operand.vmem [shape: f32[1,128], index: 9, kind: input, shape index: {}]
  %s10 = inlined_call_operand.vmem [shape: f32[128,32], index: 10, kind: input, shape index: {}]
  %s11 = inlined_call_operand.vmem [shape: f32[1,32], index: 11, kind: input, shape index: {}]
  %s12 = inlined_call_operand.hbm [shape: f32[2,8,32], index: 12, kind: output, shape index: {}]
  %s13 = sld [smem:[#allocation0]]
  $region81: #{tpu_custom_call.1} parent=0
    _
  %s15 = ssub.s32 1, %s13
  %s16 = scalar_select 0, %s15, %s13
  $region1: #{tpu_custom_call.1} parent=0
    #allocation2 [shape = 'u8[8192]{0}', space=vmem, size = 0x2000, scoped, tag = 'output window, operand 0']
    #allocation3 [shape = 's32[2]{0}', space=sflag, size = 0x8, scoped, tag = 'scoped memory for tpu_custom_call.1']
    %17 = vsyncpa [#allocation3], 0
    %s18 = scalar_lea.sflag [#allocation3], 1
    %19 = vsyncpa %s18, 0
    loop: start=0, step=1, limit=4
    $region2: #{tpu_custom_call.1} parent=1 // loop_pre_header
      _
    $region3: #{tpu_custom_call.1} parent=1 // loop_header
      %s21 = sphi 0, %s25
      %p22 = scmp.ge.s32.totalorder %s21, 4
      %s31 = sphi 0, %s33
      %s34 = sphi 0, %s31
      %s35 = sphi 0, %s34
      %s51 = sphi 0, %s35
      %s55 = sphi 0, %s55
      %s57 = sphi 0, %s55
      %s58 = sphi 0, %s57
      %s72 = sphi 0, %s58
      %s76 = sphi 0, %s76
      %s78 = sphi 0, %s76
      %s79 = sphi 0, %s78
      %s93 = sphi 0, %s79
      %s97 = sphi 0, %s97
      %s99 = sphi 0, %s97
      %s100 = sphi 0, %s99
      %s114 = sphi 0, %s100
      %s118 = sphi 0, %s118
      %s120 = sphi 0, %s118
      %s121 = sphi 0, %s120
      %s135 = sphi 0, %s121
      %s139 = sphi 0, %s139
      %s141 = sphi 0, %s139
      %s142 = sphi 0, %s141
      %s156 = sphi 0, %s142
      %s160 = sphi 0, %s160
      %s162 = sphi 0, %s160
      %s163 = sphi 0, %s162
      %s177 = sphi 0, %s163
      %s181 = sphi 0, %s181
      %s183 = sphi 0, %s181
      %s184 = sphi 0, %s183
      %s198 = sphi 0, %s184
      %s202 = sphi 0, %s202
      %s204 = sphi 0, %s202
      %s205 = sphi 0, %s204
      %s219 = sphi 0, %s205
      %s223 = sphi 0, %s223
      %s225 = sphi 0, %s223
      %s226 = sphi 0, %s225
      %s240 = sphi 0, %s226
      %s244 = sphi 0, %s244
      %s246 = sphi 0, %s244
      %s247 = sphi 0, %s246
      %s261 = sphi 0, %s247
      %s265 = sphi 0, %s265
      %s267 = sphi 0, %s265
      %s268 = sphi 0, %s267
      %s282 = sphi 0, %s268
      %s288 = sphi 0, %s290
      %s291 = sphi 0, %s288
      %s292 = sphi 0, %s291
      %s308 = sphi 0, %s292
    $region4: #{tpu_custom_call.1} parent=1 // loop_header_branch
      %24 = sbr.rel (%p22) target = $region8
    $region5: #{tpu_custom_call.1} parent=1 // loop_body
      %s26 = ssub.s32 %s21, 1
      %s27 = ssub.s32 %s21, 2
      %s28 = sadd.s32 %s21, 1
      %s29 = ssub.s32 %s21, %s28
      %p30 = scmp.eq.s32.totalorder %s29, 0
      %s32 = sadd.s32 %s31, 1
      %s33 = scalar_select %p30, %s31, %s32
      %p36 = pneg %p30
      %p37 = scmp.eq.s32.totalorder %s21, 1
      %p38 = por %p36, %p37
      %p39 = scmp.ne.s32.totalorder %s31, %s34
      %p40 = scmp.eq.s32.totalorder %s21, 0
      %p41 = por %p39, %p40
      %p42 = scmp.ne.s32.totalorder %s31, %s34
      %p43 = scmp.eq.s32.totalorder %s26, 1
      %p44 = por %p42, %p43
      %p45 = scmp.ne.s32.totalorder %s34, %s35
      %p46 = scmp.eq.s32.totalorder %s26, 0
      %p47 = por %p45, %p46
      %p48 = scmp.ne.s32.totalorder %s34, %s35
      %p49 = scmp.eq.s32.totalorder %s27, 1
      %p50 = por %p48, %p49
      %p52 = scmp.ne.s32.totalorder %s35, %s51
      %p53 = scmp.eq.s32.totalorder %s27, 0
      %p54 = por %p52, %p53
      %s56 = sadd.s32 %s55, 1
      %p59 = scmp.eq.s32.totalorder %s21, 1
      %p60 = scmp.ne.s32.totalorder %s55, %s57
      %p61 = scmp.eq.s32.totalorder %s21, 0
      %p62 = por %p60, %p61
      %p63 = scmp.ne.s32.totalorder %s55, %s57
      %p64 = scmp.eq.s32.totalorder %s26, 1
      %p65 = por %p63, %p64
      %p66 = scmp.ne.s32.totalorder %s57, %s58
      %p67 = scmp.eq.s32.totalorder %s26, 0
      %p68 = por %p66, %p67
      %p69 = scmp.ne.s32.totalorder %s57, %s58
      %p70 = scmp.eq.s32.totalorder %s27, 1
      %p71 = por %p69, %p70
      %p73 = scmp.ne.s32.totalorder %s58, %s72
      %p74 = scmp.eq.s32.totalorder %s27, 0
      %p75 = por %p73, %p74
      %s77 = sadd.s32 %s76, 1
      %p80 = scmp.eq.s32.totalorder %s21, 1
      %p81 = scmp.ne.s32.totalorder %s76, %s78
      %p82 = scmp.eq.s32.totalorder %s21, 0
      %p83 = por %p81, %p82
      %p84 = scmp.ne.s32.totalorder %s76, %s78
      %p85 = scmp.eq.s32.totalorder %s26, 1
      %p86 = por %p84, %p85
      %p87 = scmp.ne.s32.totalorder %s78, %s79
      %p88 = scmp.eq.s32.totalorder %s26, 0
      %p89 = por %p87, %p88
      %p90 = scmp.ne.s32.totalorder %s78, %s79
      %p91 = scmp.eq.s32.totalorder %s27, 1
      %p92 = por %p90, %p91
      %p94 = scmp.ne.s32.totalorder %s79, %s93
      %p95 = scmp.eq.s32.totalorder %s27, 0
      %p96 = por %p94, %p95
      %s98 = sadd.s32 %s97, 1
      %p101 = scmp.eq.s32.totalorder %s21, 1
      %p102 = scmp.ne.s32.totalorder %s97, %s99
      %p103 = scmp.eq.s32.totalorder %s21, 0
      %p104 = por %p102, %p103
      %p105 = scmp.ne.s32.totalorder %s97, %s99
      %p106 = scmp.eq.s32.totalorder %s26, 1
      %p107 = por %p105, %p106
      %p108 = scmp.ne.s32.totalorder %s99, %s100
      %p109 = scmp.eq.s32.totalorder %s26, 0
      %p110 = por %p108, %p109
      %p111 = scmp.ne.s32.totalorder %s99, %s100
      %p112 = scmp.eq.s32.totalorder %s27, 1
      %p113 = por %p111, %p112
      %p115 = scmp.ne.s32.totalorder %s100, %s114
      %p116 = scmp.eq.s32.totalorder %s27, 0
      %p117 = por %p115, %p116
      %s119 = sadd.s32 %s118, 1
      %p122 = scmp.eq.s32.totalorder %s21, 1
      %p123 = scmp.ne.s32.totalorder %s118, %s120
      %p124 = scmp.eq.s32.totalorder %s21, 0
      %p125 = por %p123, %p124
      %p126 = scmp.ne.s32.totalorder %s118, %s120
      %p127 = scmp.eq.s32.totalorder %s26, 1
      %p128 = por %p126, %p127
      %p129 = scmp.ne.s32.totalorder %s120, %s121
      %p130 = scmp.eq.s32.totalorder %s26, 0
      %p131 = por %p129, %p130
      %p132 = scmp.ne.s32.totalorder %s120, %s121
      %p133 = scmp.eq.s32.totalorder %s27, 1
      %p134 = por %p132, %p133
      %p136 = scmp.ne.s32.totalorder %s121, %s135
      %p137 = scmp.eq.s32.totalorder %s27, 0
      %p138 = por %p136, %p137
      %s140 = sadd.s32 %s139, 1
      %p143 = scmp.eq.s32.totalorder %s21, 1
      %p144 = scmp.ne.s32.totalorder %s139, %s141
      %p145 = scmp.eq.s32.totalorder %s21, 0
      %p146 = por %p144, %p145
      %p147 = scmp.ne.s32.totalorder %s139, %s141
      %p148 = scmp.eq.s32.totalorder %s26, 1
      %p149 = por %p147, %p148
      %p150 = scmp.ne.s32.totalorder %s141, %s142
      %p151 = scmp.eq.s32.totalorder %s26, 0
      %p152 = por %p150, %p151
      %p153 = scmp.ne.s32.totalorder %s141, %s142
      %p154 = scmp.eq.s32.totalorder %s27, 1
      %p155 = por %p153, %p154
      %p157 = scmp.ne.s32.totalorder %s142, %s156
      %p158 = scmp.eq.s32.totalorder %s27, 0
      %p159 = por %p157, %p158
      %s161 = sadd.s32 %s160, 1
      %p164 = scmp.eq.s32.totalorder %s21, 1
      %p165 = scmp.ne.s32.totalorder %s160, %s162
      %p166 = scmp.eq.s32.totalorder %s21, 0
      %p167 = por %p165, %p166
      %p168 = scmp.ne.s32.totalorder %s160, %s162
      %p169 = scmp.eq.s32.totalorder %s26, 1
      %p170 = por %p168, %p169
      %p171 = scmp.ne.s32.totalorder %s162, %s163
      %p172 = scmp.eq.s32.totalorder %s26, 0
      %p173 = por %p171, %p172
      %p174 = scmp.ne.s32.totalorder %s162, %s163
      %p175 = scmp.eq.s32.totalorder %s27, 1
      %p176 = por %p174, %p175
      %p178 = scmp.ne.s32.totalorder %s163, %s177
      %p179 = scmp.eq.s32.totalorder %s27, 0
      %p180 = por %p178, %p179
      %s182 = sadd.s32 %s181, 1
      %p185 = scmp.eq.s32.totalorder %s21, 1
      %p186 = scmp.ne.s32.totalorder %s181, %s183
      %p187 = scmp.eq.s32.totalorder %s21, 0
      %p188 = por %p186, %p187
      %p189 = scmp.ne.s32.totalorder %s181, %s183
      %p190 = scmp.eq.s32.totalorder %s26, 1
      %p191 = por %p189, %p190
      %p192 = scmp.ne.s32.totalorder %s183, %s184
      %p193 = scmp.eq.s32.totalorder %s26, 0
      %p194 = por %p192, %p193
      %p195 = scmp.ne.s32.totalorder %s183, %s184
      %p196 = scmp.eq.s32.totalorder %s27, 1
      %p197 = por %p195, %p196
      %p199 = scmp.ne.s32.totalorder %s184, %s198
      %p200 = scmp.eq.s32.totalorder %s27, 0
      %p201 = por %p199, %p200
      %s203 = sadd.s32 %s202, 1
      %p206 = scmp.eq.s32.totalorder %s21, 1
      %p207 = scmp.ne.s32.totalorder %s202, %s204
      %p208 = scmp.eq.s32.totalorder %s21, 0
      %p209 = por %p207, %p208
      %p210 = scmp.ne.s32.totalorder %s202, %s204
      %p211 = scmp.eq.s32.totalorder %s26, 1
      %p212 = por %p210, %p211
      %p213 = scmp.ne.s32.totalorder %s204, %s205
      %p214 = scmp.eq.s32.totalorder %s26, 0
      %p215 = por %p213, %p214
      %p216 = scmp.ne.s32.totalorder %s204, %s205
      %p217 = scmp.eq.s32.totalorder %s27, 1
      %p218 = por %p216, %p217
      %p220 = scmp.ne.s32.totalorder %s205, %s219
      %p221 = scmp.eq.s32.totalorder %s27, 0
      %p222 = por %p220, %p221
      %s224 = sadd.s32 %s223, 1
      %p227 = scmp.eq.s32.totalorder %s21, 1
      %p228 = scmp.ne.s32.totalorder %s223, %s225
      %p229 = scmp.eq.s32.totalorder %s21, 0
      %p230 = por %p228, %p229
      %p231 = scmp.ne.s32.totalorder %s223, %s225
      %p232 = scmp.eq.s32.totalorder %s26, 1
      %p233 = por %p231, %p232
      %p234 = scmp.ne.s32.totalorder %s225, %s226
      %p235 = scmp.eq.s32.totalorder %s26, 0
      %p236 = por %p234, %p235
      %p237 = scmp.ne.s32.totalorder %s225, %s226
      %p238 = scmp.eq.s32.totalorder %s27, 1
      %p239 = por %p237, %p238
      %p241 = scmp.ne.s32.totalorder %s226, %s240
      %p242 = scmp.eq.s32.totalorder %s27, 0
      %p243 = por %p241, %p242
      %s245 = sadd.s32 %s244, 1
      %p248 = scmp.eq.s32.totalorder %s21, 1
      %p249 = scmp.ne.s32.totalorder %s244, %s246
      %p250 = scmp.eq.s32.totalorder %s21, 0
      %p251 = por %p249, %p250
      %p252 = scmp.ne.s32.totalorder %s244, %s246
      %p253 = scmp.eq.s32.totalorder %s26, 1
      %p254 = por %p252, %p253
      %p255 = scmp.ne.s32.totalorder %s246, %s247
      %p256 = scmp.eq.s32.totalorder %s26, 0
      %p257 = por %p255, %p256
      %p258 = scmp.ne.s32.totalorder %s246, %s247
      %p259 = scmp.eq.s32.totalorder %s27, 1
      %p260 = por %p258, %p259
      %p262 = scmp.ne.s32.totalorder %s247, %s261
      %p263 = scmp.eq.s32.totalorder %s27, 0
      %p264 = por %p262, %p263
      %s266 = sadd.s32 %s265, 1
      %p269 = scmp.eq.s32.totalorder %s21, 1
      %p270 = scmp.ne.s32.totalorder %s265, %s267
      %p271 = scmp.eq.s32.totalorder %s21, 0
      %p272 = por %p270, %p271
      %p273 = scmp.ne.s32.totalorder %s265, %s267
      %p274 = scmp.eq.s32.totalorder %s26, 1
      %p275 = por %p273, %p274
      %p276 = scmp.ne.s32.totalorder %s267, %s268
      %p277 = scmp.eq.s32.totalorder %s26, 0
      %p278 = por %p276, %p277
      %p279 = scmp.ne.s32.totalorder %s267, %s268
      %p280 = scmp.eq.s32.totalorder %s27, 1
      %p281 = por %p279, %p280
      %p283 = scmp.ne.s32.totalorder %s268, %s282
      %p284 = scmp.eq.s32.totalorder %s27, 0
      %p285 = por %p283, %p284
      %s286 = ssub.s32 %s21, %s28
      %p287 = scmp.eq.s32.totalorder %s286, 0
      %s289 = sadd.s32 %s288, 1
      %s290 = scalar_select %p287, %s288, %s289
      %p293 = pneg %p287
      %p294 = scmp.eq.s32.totalorder %s21, 1
      %p295 = por %p293, %p294
      %p296 = scmp.ne.s32.totalorder %s288, %s291
      %p297 = scmp.eq.s32.totalorder %s21, 0
      %p298 = por %p296, %p297
      %p299 = scmp.ne.s32.totalorder %s288, %s291
      %p300 = scmp.eq.s32.totalorder %s26, 1
      %p301 = por %p299, %p300
      %p302 = scmp.ne.s32.totalorder %s291, %s292
      %p303 = scmp.eq.s32.totalorder %s26, 0
      %p304 = por %p302, %p303
      %p305 = scmp.ne.s32.totalorder %s291, %s292
      %p306 = scmp.eq.s32.totalorder %s27, 1
      %p307 = por %p305, %p306
      %p309 = scmp.ne.s32.totalorder %s292, %s308
      %p310 = scmp.eq.s32.totalorder %s27, 0
      %p311 = por %p309, %p310
      %p312 = scmp.le.s32.totalorder 1, %s21
      %p313 = scmp.lt.s32.totalorder %s21, 3
      %p314 = pnand %p312, %p313
      %p315 = pneg %p314
      // Predicated region
      $region9: #{tpu_custom_call.1} parent=5 // pred_check
        _
      $region10: #{tpu_custom_call.1} parent=5 // pred_check_branch
        %317 = sbr.rel (%p314) target = $region12
      $region11: #{tpu_custom_call.1} parent=5 // pred_region
        %s318 = ssub.s32 %s21, 1
        // Predicated region
        $region13: #{tpu_custom_call.1} parent=11 // pred_check
          %p319 = pneg %p68
        $region14: #{tpu_custom_call.1} parent=11 // pred_check_branch
          %321 = sbr.rel (%p319) target = $region16
        $region15: #{tpu_custom_call.1} parent=11 // pred_region
          _
        $region16: #{tpu_custom_call.1} parent=11 // pred_fallthru
          _
        // Predicated region
        $region17: #{tpu_custom_call.1} parent=11 // pred_check
          %p322 = pneg %p89
        $region18: #{tpu_custom_call.1} parent=11 // pred_check_branch
          %324 = sbr.rel (%p322) target = $region20
        $region19: #{tpu_custom_call.1} parent=11 // pred_region
          _
        $region20: #{tpu_custom_call.1} parent=11 // pred_fallthru
          _
        // Predicated region
        $region21: #{tpu_custom_call.1} parent=11 // pred_check
          %p325 = pneg %p110
        $region22: #{tpu_custom_call.1} parent=11 // pred_check_branch
          %327 = sbr.rel (%p325) target = $region24
        $region23: #{tpu_custom_call.1} parent=11 // pred_region
          _
        $region24: #{tpu_custom_call.1} parent=11 // pred_fallthru
          _
        // Predicated region
        $region25: #{tpu_custom_call.1} parent=11 // pred_check
          %p328 = pneg %p131
        $region26: #{tpu_custom_call.1} parent=11 // pred_check_branch
          %330 = sbr.rel (%p328) target = $region28
        $region27: #{tpu_custom_call.1} parent=11 // pred_region
          _
        $region28: #{tpu_custom_call.1} parent=11 // pred_fallthru
          _
        // Predicated region
        $region29: #{tpu_custom_call.1} parent=11 // pred_check
          %p331 = pneg %p152
        $region30: #{tpu_custom_call.1} parent=11 // pred_check_branch
          %333 = sbr.rel (%p331) target = $region32
        $region31: #{tpu_custom_call.1} parent=11 // pred_region
          _
        $region32: #{tpu_custom_call.1} parent=11 // pred_fallthru
          _
        // Predicated region
        $region33: #{tpu_custom_call.1} parent=11 // pred_check
          %p334 = pneg %p173
        $region34: #{tpu_custom_call.1} parent=11 // pred_check_branch
          %336 = sbr.rel (%p334) target = $region36
        $region35: #{tpu_custom_call.1} parent=11 // pred_region
          _
        $region36: #{tpu_custom_call.1} parent=11 // pred_fallthru
          _
        // Predicated region
        $region37: #{tpu_custom_call.1} parent=11 // pred_check
          %p337 = pneg %p194
        $region38: #{tpu_custom_call.1} parent=11 // pred_check_branch
          %339 = sbr.rel (%p337) target = $region40
        $region39: #{tpu_custom_call.1} parent=11 // pred_region
          _
        $region40: #{tpu_custom_call.1} parent=11 // pred_fallthru
          _
        // Predicated region
        $region41: #{tpu_custom_call.1} parent=11 // pred_check
          %p340 = pneg %p215
        $region42: #{tpu_custom_call.1} parent=11 // pred_check_branch
          %342 = sbr.rel (%p340) target = $region44
        $region43: #{tpu_custom_call.1} parent=11 // pred_region
          _
        $region44: #{tpu_custom_call.1} parent=11 // pred_fallthru
          _
        // Predicated region
        $region45: #{tpu_custom_call.1} parent=11 // pred_check
          %p343 = pneg %p236
        $region46: #{tpu_custom_call.1} parent=11 // pred_check_branch
          %345 = sbr.rel (%p343) target = $region48
        $region47: #{tpu_custom_call.1} parent=11 // pred_region
          _
        $region48: #{tpu_custom_call.1} parent=11 // pred_fallthru
          _
        // Predicated region
        $region49: #{tpu_custom_call.1} parent=11 // pred_check
          %p346 = pneg %p257
        $region50: #{tpu_custom_call.1} parent=11 // pred_check_branch
          %348 = sbr.rel (%p346) target = $region52
        $region51: #{tpu_custom_call.1} parent=11 // pred_region
          _
        $region52: #{tpu_custom_call.1} parent=11 // pred_fallthru
          _
        // Predicated region
        $region53: #{tpu_custom_call.1} parent=11 // pred_check
          %p349 = pneg %p278
        $region54: #{tpu_custom_call.1} parent=11 // pred_check_branch
          %351 = sbr.rel (%p349) target = $region56
        $region55: #{tpu_custom_call.1} parent=11 // pred_region
          _
        $region56: #{tpu_custom_call.1} parent=11 // pred_fallthru
          _
      $region12: #{tpu_custom_call.1} parent=5 // pred_fallthru
        _
      %p352 = scmp.lt.s32.totalorder %s21, 2
      // Predicated region
      $region57: #{tpu_custom_call.1} parent=5 // pred_check
        %p353 = pneg %p352
      $region58: #{tpu_custom_call.1} parent=5 // pred_check_branch
        %355 = sbr.rel (%p353) target = $region60
      $region59: #{tpu_custom_call.1} parent=5 // pred_region
        // Predicated region
        $region61: #{tpu_custom_call.1} parent=59 // pred_check
          %p356 = pneg %p41
        $region62: #{tpu_custom_call.1} parent=59 // pred_check_branch
          %358 = sbr.rel (%p356) target = $region64
        $region63: #{tpu_custom_call.1} parent=59 // pred_region
          %p359 = scmp.lt.s32.totalorder %s21, 1
          %s360 = scalar_select %p359, %s21, 1
          %s361 = smul.addr %s360, 8
          %s362 = scalar_lea.vmem %s0, %s361
        $region64: #{tpu_custom_call.1} parent=59 // pred_fallthru
          _
      $region60: #{tpu_custom_call.1} parent=5 // pred_fallthru
        _
      %p363 = scmp.le.s32.totalorder 1, %s21
      %p364 = scmp.lt.s32.totalorder %s21, 3
      %p365 = pnand %p363, %p364
      %p366 = pneg %p365
      // Predicated region
      $region65: #{tpu_custom_call.1} parent=5 // pred_check
        _
      $region66: #{tpu_custom_call.1} parent=5 // pred_check_branch
        %368 = sbr.rel (%p365) target = $region68
      $region67: #{tpu_custom_call.1} parent=5 // pred_region
        %s369 = ssub.s32 %s21, 1
        %p370 = scmp.lt.s32.totalorder %s26, 1
        %s371 = scalar_select %p370, %s26, 1
        %s372 = smul.addr %s371, 8
        %s373 = scalar_lea.vmem %s0, %s372
        %p374 = pneg %p47
        %p375 = pneg %p44
        %p376 = pneg %p68
        %p377 = pneg %p65
        %p378 = pneg %p89
        %p379 = pneg %p86
        %p380 = pneg %p110
        %p381 = pneg %p107
        %p382 = pneg %p131
        %p383 = pneg %p128
        %p384 = pneg %p152
        %p385 = pneg %p149
        %p386 = pneg %p173
        %p387 = pneg %p170
        %p388 = pneg %p194
        %p389 = pneg %p191
        %p390 = pneg %p215
        %p391 = pneg %p212
        %p392 = pneg %p236
        %p393 = pneg %p233
        %p394 = pneg %p257
        %p395 = pneg %p254
        %p396 = pneg %p278
        %p397 = pneg %p275
        %p398 = pneg %p304
        %p399 = pneg %p301
        %s400 = sand.u32 %s291, 1
        %s401 = scalar_lea.sflag [#allocation3], %s400
        %s402 = sand.u32 %s291, 1
        %s403 = smul.addr %s402, 8
        %s404 = scalar_lea.vmem [#allocation2], %s403
        %p405 = scmp.lt.s32.totalorder %s26, 1
        %s406 = scalar_select %p405, %s26, 1
        %s407 = smul.addr %s406, 8
        %s408 = scalar_lea.vmem %s0, %s407
        %v409 = vld [vmem:[%s408] sm:$0xff]
        %vm410 = vcmask 261120
        %v411 = vsel %vm410, %v409, 0.0
        %412 = vadd.xlane.f32.xlu0 %v411
        %v413 = vpop.xlane.xlu0 %412
        %v414 = vrcp.pop 32.0
        %v415 = vmul.f32 %v413, %v414
        %v416 = vsub.f32 %v409, %v415
        %v417 = vmul.f32 %v416, %v416
        %v418 = vsel %vm410, %v417, 0.0
        %419 = vadd.xlane.f32.xlu0 %v418
        %v420 = vpop.xlane.xlu0 %419
        %v421 = vmul.f32 %v420, %v414
        %v422 = vadd.f32 %v421, 1e-05
        %v423 = vrsqrt.pop %v422
        %v424 = vld [vmem:[%s1] sm:$0x1]
        %v425 = vmul.f32 %v416, %v423
        %v427 = vlaneseq
        %v428 = vshrl.u32 %v427, 7
        %v429 = vsub.s32 0, %v428
        %v430 = vrot.slane %v424, %v429
        %v432 = vmul.f32 %v430, %v425
        %v433 = vld [vmem:[%s2] sm:$0x1]
        %v435 = vlaneseq
        %v436 = vshrl.u32 %v435, 7
        %v437 = vsub.s32 0, %v436
        %v438 = vrot.slane %v433, %v437
        %v440 = vadd.f32 %v432, %v438
        %v441 = vld [vmem:[%s3] sm:$0xff]
        %v442 = vld [vmem:[%s3 + $0x8] sm:$0xff]
        %v443 = vld [vmem:[%s3 + $0x10] sm:$0xff]
        %v444 = vld [vmem:[%s3 + $0x18] sm:$0xff]
        %v446 = vsel %vm410, %v440, 0
        %448 = vmatprep.subr.mxu0 0.0
        %449 = vmatpush1.msra.mxu0 0.0
        %450 = vmatprep.subr.mxu0 0.0
        %451 = vmatpush1.msra.mxu0 0.0
        %452 = vmatprep.subr.mxu0 0.0
        %453 = vmatpush1.msra.mxu0 0.0
        %454 = vmatprep.subr.mxu0 0.0
        %455 = vmatpush1.msra.mxu0 0.0
        %456 = vmatprep.subr.mxu0 0.0
        %457 = vmatpush1.msra.mxu0 0.0
        %458 = vmatprep.subr.mxu0 0.0
        %459 = vmatpush1.msra.mxu0 0.0
        %460 = vmatprep.subr.mxu0 0.0
        %461 = vmatpush1.msra.mxu0 0.0
        %462 = vmatprep.subr.mxu0 0.0
        %463 = vmatpush1.msra.mxu0 0.0
        %464 = vmatprep.subr.mxu0 0.0
        %465 = vmatpush1.msra.mxu0 0.0
        %466 = vmatprep.subr.mxu0 0.0
        %467 = vmatpush1.msra.mxu0 0.0
        %468 = vmatprep.subr.mxu0 0.0
        %469 = vmatpush1.msra.mxu0 0.0
        %470 = vmatprep.subr.mxu0 0.0
        %471 = vmatpush1.msra.mxu0 0.0
        %472 = vmatprep.subr.mxu0 0.0
        %473 = vmatpush1.msra.mxu0 %v444
        %474 = vmatprep.subr.mxu0 0.0
        %475 = vmatpush1.msra.mxu0 %v443
        %476 = vmatprep.subr.mxu0 0.0
        %477 = vmatpush1.msra.mxu0 %v442
        %478 = vmatprep.subr.mxu0 0.0
        %479 = vmatpush1.msra.mxu0 %v441
        %480 = vmatprep.subr.mxu0 0.0
        %481 = vmatpush2.msra.mxu0 0.0
        %482 = vmatprep.subr.mxu0 0.0
        %483 = vmatpush2.msra.mxu0 0.0
        %484 = vmatprep.subr.mxu0 0.0
        %485 = vmatpush2.msra.mxu0 0.0
        %486 = vmatprep.subr.mxu0 0.0
        %487 = vmatpush2.msra.mxu0 0.0
        %488 = vmatprep.subr.mxu0 0.0
        %489 = vmatpush2.msra.mxu0 0.0
        %490 = vmatprep.subr.mxu0 0.0
        %491 = vmatpush2.msra.mxu0 0.0
        %492 = vmatprep.subr.mxu0 0.0
        %493 = vmatpush2.msra.mxu0 0.0
        %494 = vmatprep.subr.mxu0 0.0
        %495 = vmatpush2.msra.mxu0 0.0
        %496 = vmatprep.subr.mxu0 0.0
        %497 = vmatpush2.msra.mxu0 0.0
        %498 = vmatprep.subr.mxu0 0.0
        %499 = vmatpush2.msra.mxu0 0.0
        %500 = vmatprep.subr.mxu0 0.0
        %501 = vmatpush2.msra.mxu0 0.0
        %502 = vmatprep.subr.mxu0 0.0
        %503 = vmatpush2.msra.mxu0 0.0
        %504 = vmatprep.subr.mxu0 0.0
        %505 = vmatpush2.msra.mxu0 0.0
        %506 = vmatprep.subr.mxu0 0.0
        %507 = vmatpush2.msra.mxu0 0.0
        %508 = vmatprep.subr.mxu0 0.0
        %509 = vmatpush2.msra.mxu0 0.0
        %510 = vmatprep.subr.mxu0 0.0
        %511 = vmatpush2.msra.mxu0 0.0
        %512 = vmatprep.mubr.f32.mxu0 0.0
        %513 = vmatmul.mubr.f32.gmra.mxu0 %v446
        %v514 = vpop.f32.mrf.mxu0
        %v515 = vadd.f32 0.0, %v514
        %v516 = vpop.f32.mrf.mxu0
        %517 = vdwg.mxu0
        %519 = vrot.lane.b32.xlu0 %v515, 120
        %v520 = vpop.permute.xlu0 %519
        %522 = vrot.lane.b32.xlu0 %v515, 112
        %v523 = vpop.permute.xlu0 %522
        %525 = vrot.lane.b32.xlu0 %v515, 104
        %v526 = vpop.permute.xlu0 %525
        %v528 = vcombine.low %v515, %v523
        %v529 = vcombine.high %v515, %v523
        %v531 = vunpack.c.l.s4 1983009808
        %v532 = vunpack.c.0.s8 %v531
        %v533 = vlaneseq
        %v534 = vshrl.u32 %v533, 7
        %v535 = vsub.s32 %v532, %v534
        %v536 = vrot.slane %v528, %v535
        %v538 = vunpack.c.l.s4 1983009808
        %v539 = vunpack.c.0.s8 %v538
        %v540 = vlaneseq
        %v541 = vshrl.u32 %v540, 7
        %v542 = vsub.s32 %v539, %v541
        %v543 = vrot.slane %v529, %v542
        %v544 = vcombine.low %v520, %v526
        %v545 = vcombine.high %v520, %v526
        %v547 = vunpack.c.l.s4 1983009808
        %v548 = vunpack.c.0.s8 %v547
        %v549 = vlaneseq
        %v550 = vshrl.u32 %v549, 7
        %v551 = vsub.s32 %v548, %v550
        %v552 = vrot.slane %v544, %v551
        %v554 = vunpack.c.l.s4 1983009808
        %v555 = vunpack.c.0.s8 %v554
        %v556 = vlaneseq
        %v557 = vshrl.u32 %v556, 7
        %v558 = vsub.s32 %v555, %v557
        %v559 = vrot.slane %v545, %v558
        %v560 = vcombine.low %v536, %v552
        %v561 = vcombine.high %v536, %v552
        %v563 = vunpack.c.l.s4 1934713408
        %v564 = vunpack.c.0.s8 %v563
        %v565 = vlaneseq
        %v566 = vshrl.u32 %v565, 7
        %v567 = vsub.s32 %v564, %v566
        %v568 = vrot.slane %v560, %v567
        %v570 = vunpack.c.l.s4 1934713408
        %v571 = vunpack.c.0.s8 %v570
        %v572 = vlaneseq
        %v573 = vshrl.u32 %v572, 7
        %v574 = vsub.s32 %v571, %v573
        %v575 = vrot.slane %v561, %v574
        %v576 = vcombine.low %v543, %v559
        %v577 = vcombine.high %v543, %v559
        %v579 = vunpack.c.l.s4 1934713408
        %v580 = vunpack.c.0.s8 %v579
        %v581 = vlaneseq
        %v582 = vshrl.u32 %v581, 7
        %v583 = vsub.s32 %v580, %v582
        %v584 = vrot.slane %v576, %v583
        %v586 = vunpack.c.l.s4 1934713408
        %v587 = vunpack.c.0.s8 %v586
        %v588 = vlaneseq
        %v589 = vshrl.u32 %v588, 7
        %v590 = vsub.s32 %v587, %v589
        %v591 = vrot.slane %v577, %v590
        %v592 = vcombine.high %v568, 0.0
        %v593 = vcombine.high %v575, 0.0
        %v594 = vcombine.high %v584, 0.0
        %v595 = vcombine.high %v591, 0.0
        %v596 = vcombine.low %v568, %v575
        %v598 = vunpack.c.l.s4 1983009808
        %v599 = vunpack.c.0.s8 %v598
        %v600 = vlaneseq
        %v601 = vshrl.u32 %v600, 7
        %v602 = vsub.s32 %v599, %v601
        %v603 = vrot.slane %v596, %v602
        %v604 = vcombine.low %v592, %v593
        %v606 = vunpack.c.l.s4 1983009808
        %v607 = vunpack.c.0.s8 %v606
        %v608 = vlaneseq
        %v609 = vshrl.u32 %v608, 7
        %v610 = vsub.s32 %v607, %v609
        %v611 = vrot.slane %v604, %v610
        %v612 = vcombine.low %v584, %v591
        %v614 = vunpack.c.l.s4 1983009808
        %v615 = vunpack.c.0.s8 %v614
        %v616 = vlaneseq
        %v617 = vshrl.u32 %v616, 7
        %v618 = vsub.s32 %v615, %v617
        %v619 = vrot.slane %v612, %v618
        %v620 = vcombine.low %v594, %v595
        %v622 = vunpack.c.l.s4 1983009808
        %v623 = vunpack.c.0.s8 %v622
        %v624 = vlaneseq
        %v625 = vshrl.u32 %v624, 7
        %v626 = vsub.s32 %v623, %v625
        %v627 = vrot.slane %v620, %v626
        %v628 = vcombine.low %v603, %v611
        %v629 = vcombine.high %v603, %v611
        %v631 = vunpack.c.l.s4 1934713408
        %v632 = vunpack.c.0.s8 %v631
        %v633 = vlaneseq
        %v634 = vshrl.u32 %v633, 7
        %v635 = vsub.s32 %v632, %v634
        %v636 = vrot.slane %v628, %v635
        %v638 = vunpack.c.l.s4 1934713408
        %v639 = vunpack.c.0.s8 %v638
        %v640 = vlaneseq
        %v641 = vshrl.u32 %v640, 7
        %v642 = vsub.s32 %v639, %v641
        %v643 = vrot.slane %v629, %v642
        %v644 = vcombine.low %v619, %v627
        %v645 = vcombine.high %v619, %v627
        %v647 = vunpack.c.l.s4 1934713408
        %v648 = vunpack.c.0.s8 %v647
        %v649 = vlaneseq
        %v650 = vshrl.u32 %v649, 7
        %v651 = vsub.s32 %v648, %v650
        %v652 = vrot.slane %v644, %v651
        %v654 = vunpack.c.l.s4 1934713408
        %v655 = vunpack.c.0.s8 %v654
        %v656 = vlaneseq
        %v657 = vshrl.u32 %v656, 7
        %v658 = vsub.s32 %v655, %v657
        %v659 = vrot.slane %v645, %v658
        %v660 = vcombine.low %v636, %v652
        %v661 = vcombine.high %v636, %v652
        %v662 = vcombine.low %v643, %v659
        %v663 = vcombine.high %v643, %v659
        %664 = vrot.lane.b32.xlu0 %v515, 96
        %v665 = vpop.permute.xlu0 %664
        %666 = vrot.lane.b32.xlu0 %v520, 96
        %v667 = vpop.permute.xlu0 %666
        %668 = vrot.lane.b32.xlu0 %v523, 96
        %v669 = vpop.permute.xlu0 %668
        %670 = vrot.lane.b32.xlu0 %v526, 96
        %v671 = vpop.permute.xlu0 %670
        %v676 = vcombine.low %v665, %v669
        %v677 = vcombine.high %v665, %v669
        %v679 = vunpack.c.l.s4 1983009808
        %v680 = vunpack.c.0.s8 %v679
        %v681 = vlaneseq
        %v682 = vshrl.u32 %v681, 7
        %v683 = vsub.s32 %v680, %v682
        %v684 = vrot.slane %v676, %v683
        %v686 = vunpack.c.l.s4 1983009808
        %v687 = vunpack.c.0.s8 %v686
        %v688 = vlaneseq
        %v689 = vshrl.u32 %v688, 7
        %v690 = vsub.s32 %v687, %v689
        %v691 = vrot.slane %v677, %v690
        %v692 = vcombine.low %v667, %v671
        %v693 = vcombine.high %v667, %v671
        %v695 = vunpack.c.l.s4 1983009808
        %v696 = vunpack.c.0.s8 %v695
        %v697 = vlaneseq
        %v698 = vshrl.u32 %v697, 7
        %v699 = vsub.s32 %v696, %v698
        %v700 = vrot.slane %v692, %v699
        %v702 = vunpack.c.l.s4 1983009808
        %v703 = vunpack.c.0.s8 %v702
        %v704 = vlaneseq
        %v705 = vshrl.u32 %v704, 7
        %v706 = vsub.s32 %v703, %v705
        %v707 = vrot.slane %v693, %v706
        %v708 = vcombine.low %v684, %v700
        %v709 = vcombine.high %v684, %v700
        %v711 = vunpack.c.l.s4 1934713408
        %v712 = vunpack.c.0.s8 %v711
        %v713 = vlaneseq
        %v714 = vshrl.u32 %v713, 7
        %v715 = vsub.s32 %v712, %v714
        %v716 = vrot.slane %v708, %v715
        %v718 = vunpack.c.l.s4 1934713408
        %v719 = vunpack.c.0.s8 %v718
        %v720 = vlaneseq
        %v721 = vshrl.u32 %v720, 7
        %v722 = vsub.s32 %v719, %v721
        %v723 = vrot.slane %v709, %v722
        %v724 = vcombine.low %v691, %v707
        %v725 = vcombine.high %v691, %v707
        %v727 = vunpack.c.l.s4 1934713408
        %v728 = vunpack.c.0.s8 %v727
        %v729 = vlaneseq
        %v730 = vshrl.u32 %v729, 7
        %v731 = vsub.s32 %v728, %v730
        %v732 = vrot.slane %v724, %v731
        %v734 = vunpack.c.l.s4 1934713408
        %v735 = vunpack.c.0.s8 %v734
        %v736 = vlaneseq
        %v737 = vshrl.u32 %v736, 7
        %v738 = vsub.s32 %v735, %v737
        %v739 = vrot.slane %v725, %v738
        %v740 = vcombine.high %v716, 0.0
        %v741 = vcombine.high %v723, 0.0
        %v742 = vcombine.high %v732, 0.0
        %v743 = vcombine.high %v739, 0.0
        %v744 = vcombine.low %v716, %v723
        %v746 = vunpack.c.l.s4 1983009808
        %v747 = vunpack.c.0.s8 %v746
        %v748 = vlaneseq
        %v749 = vshrl.u32 %v748, 7
        %v750 = vsub.s32 %v747, %v749
        %v751 = vrot.slane %v744, %v750
        %v752 = vcombine.low %v740, %v741
        %v754 = vunpack.c.l.s4 1983009808
        %v755 = vunpack.c.0.s8 %v754
        %v756 = vlaneseq
        %v757 = vshrl.u32 %v756, 7
        %v758 = vsub.s32 %v755, %v757
        %v759 = vrot.slane %v752, %v758
        %v760 = vcombine.low %v732, %v739
        %v762 = vunpack.c.l.s4 1983009808
        %v763 = vunpack.c.0.s8 %v762
        %v764 = vlaneseq
        %v765 = vshrl.u32 %v764, 7
        %v766 = vsub.s32 %v763, %v765
        %v767 = vrot.slane %v760, %v766
        %v768 = vcombine.low %v742, %v743
        %v770 = vunpack.c.l.s4 1983009808
        %v771 = vunpack.c.0.s8 %v770
        %v772 = vlaneseq
        %v773 = vshrl.u32 %v772, 7
        %v774 = vsub.s32 %v771, %v773
        %v775 = vrot.slane %v768, %v774
        %v776 = vcombine.low %v751, %v759
        %v777 = vcombine.high %v751, %v759
        %v779 = vunpack.c.l.s4 1934713408
        %v780 = vunpack.c.0.s8 %v779
        %v781 = vlaneseq
        %v782 = vshrl.u32 %v781, 7
        %v783 = vsub.s32 %v780, %v782
        %v784 = vrot.slane %v776, %v783
        %v786 = vunpack.c.l.s4 1934713408
        %v787 = vunpack.c.0.s8 %v786
        %v788 = vlaneseq
        %v789 = vshrl.u32 %v788, 7
        %v790 = vsub.s32 %v787, %v789
        %v791 = vrot.slane %v777, %v790
        %v792 = vcombine.low %v767, %v775
        %v793 = vcombine.high %v767, %v775
        %v795 = vunpack.c.l.s4 1934713408
        %v796 = vunpack.c.0.s8 %v795
        %v797 = vlaneseq
        %v798 = vshrl.u32 %v797, 7
        %v799 = vsub.s32 %v796, %v798
        %v800 = vrot.slane %v792, %v799
        %v802 = vunpack.c.l.s4 1934713408
        %v803 = vunpack.c.0.s8 %v802
        %v804 = vlaneseq
        %v805 = vshrl.u32 %v804, 7
        %v806 = vsub.s32 %v803, %v805
        %v807 = vrot.slane %v793, %v806
        %v808 = vcombine.low %v784, %v800
        %v809 = vcombine.high %v784, %v800
        %v810 = vcombine.low %v791, %v807
        %v811 = vcombine.high %v791, %v807
        %812 = vrot.lane.b32.xlu0 %v515, 64
        %v813 = vpop.permute.xlu0 %812
        %814 = vrot.lane.b32.xlu0 %v520, 64
        %v815 = vpop.permute.xlu0 %814
        %816 = vrot.lane.b32.xlu0 %v523, 64
        %v817 = vpop.permute.xlu0 %816
        %818 = vrot.lane.b32.xlu0 %v526, 64
        %v819 = vpop.permute.xlu0 %818
        %v824 = vcombine.low %v813, %v817
        %v825 = vcombine.high %v813, %v817
        %v827 = vunpack.c.l.s4 1983009808
        %v828 = vunpack.c.0.s8 %v827
        %v829 = vlaneseq
        %v830 = vshrl.u32 %v829, 7
        %v831 = vsub.s32 %v828, %v830
        %v832 = vrot.slane %v824, %v831
        %v834 = vunpack.c.l.s4 1983009808
        %v835 = vunpack.c.0.s8 %v834
        %v836 = vlaneseq
        %v837 = vshrl.u32 %v836, 7
        %v838 = vsub.s32 %v835, %v837
        %v839 = vrot.slane %v825, %v838
        %v840 = vcombine.low %v815, %v819
        %v841 = vcombine.high %v815, %v819
        %v843 = vunpack.c.l.s4 1983009808
        %v844 = vunpack.c.0.s8 %v843
        %v845 = vlaneseq
        %v846 = vshrl.u32 %v845, 7
        %v847 = vsub.s32 %v844, %v846
        %v848 = vrot.slane %v840, %v847
        %v850 = vunpack.c.l.s4 1983009808
        %v851 = vunpack.c.0.s8 %v850
        %v852 = vlaneseq
        %v853 = vshrl.u32 %v852, 7
        %v854 = vsub.s32 %v851, %v853
        %v855 = vrot.slane %v841, %v854
        %v856 = vcombine.low %v832, %v848
        %v857 = vcombine.high %v832, %v848
        %v859 = vunpack.c.l.s4 1934713408
        %v860 = vunpack.c.0.s8 %v859
        %v861 = vlaneseq
        %v862 = vshrl.u32 %v861, 7
        %v863 = vsub.s32 %v860, %v862
        %v864 = vrot.slane %v856, %v863
        %v866 = vunpack.c.l.s4 1934713408
        %v867 = vunpack.c.0.s8 %v866
        %v868 = vlaneseq
        %v869 = vshrl.u32 %v868, 7
        %v870 = vsub.s32 %v867, %v869
        %v871 = vrot.slane %v857, %v870
        %v872 = vcombine.low %v839, %v855
        %v873 = vcombine.high %v839, %v855
        %v875 = vunpack.c.l.s4 1934713408
        %v876 = vunpack.c.0.s8 %v875
        %v877 = vlaneseq
        %v878 = vshrl.u32 %v877, 7
        %v879 = vsub.s32 %v876, %v878
        %v880 = vrot.slane %v872, %v879
        %v882 = vunpack.c.l.s4 1934713408
        %v883 = vunpack.c.0.s8 %v882
        %v884 = vlaneseq
        %v885 = vshrl.u32 %v884, 7
        %v886 = vsub.s32 %v883, %v885
        %v887 = vrot.slane %v873, %v886
        %v888 = vcombine.high %v864, 0.0
        %v889 = vcombine.high %v871, 0.0
        %v890 = vcombine.high %v880, 0.0
        %v891 = vcombine.high %v887, 0.0
        %v892 = vcombine.low %v864, %v871
        %v894 = vunpack.c.l.s4 1983009808
        %v895 = vunpack.c.0.s8 %v894
        %v896 = vlaneseq
        %v897 = vshrl.u32 %v896, 7
        %v898 = vsub.s32 %v895, %v897
        %v899 = vrot.slane %v892, %v898
        %v900 = vcombine.low %v888, %v889
        %v902 = vunpack.c.l.s4 1983009808
        %v903 = vunpack.c.0.s8 %v902
        %v904 = vlaneseq
        %v905 = vshrl.u32 %v904, 7
        %v906 = vsub.s32 %v903, %v905
        %v907 = vrot.slane %v900, %v906
        %v908 = vcombine.low %v880, %v887
        %v910 = vunpack.c.l.s4 1983009808
        %v911 = vunpack.c.0.s8 %v910
        %v912 = vlaneseq
        %v913 = vshrl.u32 %v912, 7
        %v914 = vsub.s32 %v911, %v913
        %v915 = vrot.slane %v908, %v914
        %v916 = vcombine.low %v890, %v891
        %v918 = vunpack.c.l.s4 1983009808
        %v919 = vunpack.c.0.s8 %v918
        %v920 = vlaneseq
        %v921 = vshrl.u32 %v920, 7
        %v922 = vsub.s32 %v919, %v921
        %v923 = vrot.slane %v916, %v922
        %v924 = vcombine.low %v899, %v907
        %v925 = vcombine.high %v899, %v907
        %v927 = vunpack.c.l.s4 1934713408
        %v928 = vunpack.c.0.s8 %v927
        %v929 = vlaneseq
        %v930 = vshrl.u32 %v929, 7
        %v931 = vsub.s32 %v928, %v930
        %v932 = vrot.slane %v924, %v931
        %v934 = vunpack.c.l.s4 1934713408
        %v935 = vunpack.c.0.s8 %v934
        %v936 = vlaneseq
        %v937 = vshrl.u32 %v936, 7
        %v938 = vsub.s32 %v935, %v937
        %v939 = vrot.slane %v925, %v938
        %v940 = vcombine.low %v915, %v923
        %v941 = vcombine.high %v915, %v923
        %v943 = vunpack.c.l.s4 1934713408
        %v944 = vunpack.c.0.s8 %v943
        %v945 = vlaneseq
        %v946 = vshrl.u32 %v945, 7
        %v947 = vsub.s32 %v944, %v946
        %v948 = vrot.slane %v940, %v947
        %v950 = vunpack.c.l.s4 1934713408
        %v951 = vunpack.c.0.s8 %v950
        %v952 = vlaneseq
        %v953 = vshrl.u32 %v952, 7
        %v954 = vsub.s32 %v951, %v953
        %v955 = vrot.slane %v941, %v954
        %v956 = vcombine.low %v932, %v948
        %v957 = vcombine.high %v932, %v948
        %v958 = vcombine.low %v939, %v955
        %v959 = vcombine.high %v939, %v955
        %vm960 = vcmask 64512
        %v962 = vsel %vm960, %v660, 0
        %v965 = vsel %vm960, %v808, 0
        %967 = vmatprep.subr.mxu0 0.0
        %968 = vmatpush1.xpose.msra.mxu0 0.0
        %969 = vmatprep.subr.mxu0 0.0
        %970 = vmatpush1.xpose.msra.mxu0 0.0
        %971 = vmatprep.subr.mxu0 0.0
        %972 = vmatpush1.xpose.msra.mxu0 0.0
        %973 = vmatprep.subr.mxu0 0.0
        %974 = vmatpush1.xpose.msra.mxu0 0.0
        %975 = vmatprep.subr.mxu0 0.0
        %976 = vmatpush1.xpose.msra.mxu0 0.0
        %977 = vmatprep.subr.mxu0 0.0
        %978 = vmatpush1.xpose.msra.mxu0 0.0
        %979 = vmatprep.subr.mxu0 0.0
        %980 = vmatpush1.xpose.msra.mxu0 0.0
        %981 = vmatprep.subr.mxu0 0.0
        %982 = vmatpush1.xpose.msra.mxu0 0.0
        %983 = vmatprep.subr.mxu0 0.0
        %984 = vmatpush1.xpose.msra.mxu0 0.0
        %985 = vmatprep.subr.mxu0 0.0
        %986 = vmatpush1.xpose.msra.mxu0 0.0
        %987 = vmatprep.subr.mxu0 0.0
        %988 = vmatpush1.xpose.msra.mxu0 0.0
        %989 = vmatprep.subr.mxu0 0.0
        %990 = vmatpush1.xpose.msra.mxu0 0.0
        %991 = vmatprep.subr.mxu0 0.0
        %992 = vmatpush1.xpose.msra.mxu0 0.0
        %993 = vmatprep.subr.mxu0 0.0
        %994 = vmatpush1.xpose.msra.mxu0 0.0
        %995 = vmatprep.subr.mxu0 0.0
        %996 = vmatpush1.xpose.msra.mxu0 0.0
        %997 = vmatprep.subr.mxu0 0.0
        %998 = vmatpush1.xpose.msra.mxu0 %v965
        %999 = vmatprep.subr.mxu0 0.0
        %1000 = vmatpush2.xpose.msra.mxu0 0.0
        %1001 = vmatprep.subr.mxu0 0.0
        %1002 = vmatpush2.xpose.msra.mxu0 0.0
        %1003 = vmatprep.subr.mxu0 0.0
        %1004 = vmatpush2.xpose.msra.mxu0 0.0
        %1005 = vmatprep.subr.mxu0 0.0
        %1006 = vmatpush2.xpose.msra.mxu0 0.0
        %1007 = vmatprep.subr.mxu0 0.0
        %1008 = vmatpush2.xpose.msra.mxu0 0.0
        %1009 = vmatprep.subr.mxu0 0.0
        %1010 = vmatpush2.xpose.msra.mxu0 0.0
        %1011 = vmatprep.subr.mxu0 0.0
        %1012 = vmatpush2.xpose.msra.mxu0 0.0
        %1013 = vmatprep.subr.mxu0 0.0
        %1014 = vmatpush2.xpose.msra.mxu0 0.0
        %1015 = vmatprep.subr.mxu0 0.0
        %1016 = vmatpush2.xpose.msra.mxu0 0.0
        %1017 = vmatprep.subr.mxu0 0.0
        %1018 = vmatpush2.xpose.msra.mxu0 0.0
        %1019 = vmatprep.subr.mxu0 0.0
        %1020 = vmatpush2.xpose.msra.mxu0 0.0
        %1021 = vmatprep.subr.mxu0 0.0
        %1022 = vmatpush2.xpose.msra.mxu0 0.0
        %1023 = vmatprep.subr.mxu0 0.0
        %1024 = vmatpush2.xpose.msra.mxu0 0.0
        %1025 = vmatprep.subr.mxu0 0.0
        %1026 = vmatpush2.xpose.msra.mxu0 0.0
        %1027 = vmatprep.subr.mxu0 0.0
        %1028 = vmatpush2.xpose.msra.mxu0 0.0
        %1029 = vmatprep.subr.mxu0 0.0
        %1030 = vmatpush2.xpose.msra.mxu0 0.0
        %1031 = vmatprep.mubr.f32.mxu0 0.0
        %1032 = vmatmul.mubr.f32.gmra.mxu0 %v962
        %v1033 = vpop.f32.mrf.mxu0
        %v1034 = vadd.f32 0.0, %v1033
        %v1035 = vpop.f32.mrf.mxu0
        %1036 = vdwg.mxu0
        %v1038 = vsel %vm960, %v661, 0
        %v1041 = vsel %vm960, %v809, 0
        %1043 = vmatprep.subr.mxu0 0.0
        %1044 = vmatpush1.xpose.msra.mxu0 0.0
        %1045 = vmatprep.subr.mxu0 0.0
        %1046 = vmatpush1.xpose.msra.mxu0 0.0
        %1047 = vmatprep.subr.mxu0 0.0
        %1048 = vmatpush1.xpose.msra.mxu0 0.0
        %1049 = vmatprep.subr.mxu0 0.0
        %1050 = vmatpush1.xpose.msra.mxu0 0.0
        %1051 = vmatprep.subr.mxu0 0.0
        %1052 = vmatpush1.xpose.msra.mxu0 0.0
        %1053 = vmatprep.subr.mxu0 0.0
        %1054 = vmatpush1.xpose.msra.mxu0 0.0
        %1055 = vmatprep.subr.mxu0 0.0
        %1056 = vmatpush1.xpose.msra.mxu0 0.0
        %1057 = vmatprep.subr.mxu0 0.0
        %1058 = vmatpush1.xpose.msra.mxu0 0.0
        %1059 = vmatprep.subr.mxu0 0.0
        %1060 = vmatpush1.xpose.msra.mxu0 0.0
        %1061 = vmatprep.subr.mxu0 0.0
        %1062 = vmatpush1.xpose.msra.mxu0 0.0
        %1063 = vmatprep.subr.mxu0 0.0
        %1064 = vmatpush1.xpose.msra.mxu0 0.0
        %1065 = vmatprep.subr.mxu0 0.0
        %1066 = vmatpush1.xpose.msra.mxu0 0.0
        %1067 = vmatprep.subr.mxu0 0.0
        %1068 = vmatpush1.xpose.msra.mxu0 0.0
        %1069 = vmatprep.subr.mxu0 0.0
        %1070 = vmatpush1.xpose.msra.mxu0 0.0
        %1071 = vmatprep.subr.mxu0 0.0
        %1072 = vmatpush1.xpose.msra.mxu0 0.0
        %1073 = vmatprep.subr.mxu0 0.0
        %1074 = vmatpush1.xpose.msra.mxu0 %v1041
        %1075 = vmatprep.subr.mxu0 0.0
        %1076 = vmatpush2.xpose.msra.mxu0 0.0
        %1077 = vmatprep.subr.mxu0 0.0
        %1078 = vmatpush2.xpose.msra.mxu0 0.0
        %1079 = vmatprep.subr.mxu0 0.0
        %1080 = vmatpush2.xpose.msra.mxu0 0.0
        %1081 = vmatprep.subr.mxu0 0.0
        %1082 = vmatpush2.xpose.msra.mxu0 0.0
        %1083 = vmatprep.subr.mxu0 0.0
        %1084 = vmatpush2.xpose.msra.mxu0 0.0
        %1085 = vmatprep.subr.mxu0 0.0
        %1086 = vmatpush2.xpose.msra.mxu0 0.0
        %1087 = vmatprep.subr.mxu0 0.0
        %1088 = vmatpush2.xpose.msra.mxu0 0.0
        %1089 = vmatprep.subr.mxu0 0.0
        %1090 = vmatpush2.xpose.msra.mxu0 0.0
        %1091 = vmatprep.subr.mxu0 0.0
        %1092 = vmatpush2.xpose.msra.mxu0 0.0
        %1093 = vmatprep.subr.mxu0 0.0
        %1094 = vmatpush2.xpose.msra.mxu0 0.0
        %1095 = vmatprep.subr.mxu0 0.0
        %1096 = vmatpush2.xpose.msra.mxu0 0.0
        %1097 = vmatprep.subr.mxu0 0.0
        %1098 = vmatpush2.xpose.msra.mxu0 0.0
        %1099 = vmatprep.subr.mxu0 0.0
        %1100 = vmatpush2.xpose.msra.mxu0 0.0
        %1101 = vmatprep.subr.mxu0 0.0
        %1102 = vmatpush2.xpose.msra.mxu0 0.0
        %1103 = vmatprep.subr.mxu0 0.0
        %1104 = vmatpush2.xpose.msra.mxu0 0.0
        %1105 = vmatprep.subr.mxu0 0.0
        %1106 = vmatpush2.xpose.msra.mxu0 0.0
        %1107 = vmatprep.mubr.f32.mxu0 0.0
        %1108 = vmatmul.mubr.f32.gmra.mxu0 %v1038
        %v1109 = vpop.f32.mrf.mxu0
        %v1110 = vadd.f32 0.0, %v1109
        %v1111 = vpop.f32.mrf.mxu0
        %1112 = vdwg.mxu0
        %v1114 = vsel %vm960, %v662, 0
        %v1117 = vsel %vm960, %v810, 0
        %1119 = vmatprep.subr.mxu0 0.0
        %1120 = vmatpush1.xpose.msra.mxu0 0.0
        %1121 = vmatprep.subr.mxu0 0.0
        %1122 = vmatpush1.xpose.msra.mxu0 0.0
        %1123 = vmatprep.subr.mxu0 0.0
        %1124 = vmatpush1.xpose.msra.mxu0 0.0
        %1125 = vmatprep.subr.mxu0 0.0
        %1126 = vmatpush1.xpose.msra.mxu0 0.0
        %1127 = vmatprep.subr.mxu0 0.0
        %1128 = vmatpush1.xpose.msra.mxu0 0.0
        %1129 = vmatprep.subr.mxu0 0.0
        %1130 = vmatpush1.xpose.msra.mxu0 0.0
        %1131 = vmatprep.subr.mxu0 0.0
        %1132 = vmatpush1.xpose.msra.mxu0 0.0
        %1133 = vmatprep.subr.mxu0 0.0
        %1134 = vmatpush1.xpose.msra.mxu0 0.0
        %1135 = vmatprep.subr.mxu0 0.0
        %1136 = vmatpush1.xpose.msra.mxu0 0.0
        %1137 = vmatprep.subr.mxu0 0.0
        %1138 = vmatpush1.xpose.msra.mxu0 0.0
        %1139 = vmatprep.subr.mxu0 0.0
        %1140 = vmatpush1.xpose.msra.mxu0 0.0
        %1141 = vmatprep.subr.mxu0 0.0
        %1142 = vmatpush1.xpose.msra.mxu0 0.0
        %1143 = vmatprep.subr.mxu0 0.0
        %1144 = vmatpush1.xpose.msra.mxu0 0.0
        %1145 = vmatprep.subr.mxu0 0.0
        %1146 = vmatpush1.xpose.msra.mxu0 0.0
        %1147 = vmatprep.subr.mxu0 0.0
        %1148 = vmatpush1.xpose.msra.mxu0 0.0
        %1149 = vmatprep.subr.mxu0 0.0
        %1150 = vmatpush1.xpose.msra.mxu0 %v1117
        %1151 = vmatprep.subr.mxu0 0.0
        %1152 = vmatpush2.xpose.msra.mxu0 0.0
        %1153 = vmatprep.subr.mxu0 0.0
        %1154 = vmatpush2.xpose.msra.mxu0 0.0
        %1155 = vmatprep.subr.mxu0 0.0
        %1156 = vmatpush2.xpose.msra.mxu0 0.0
        %1157 = vmatprep.subr.mxu0 0.0
        %1158 = vmatpush2.xpose.msra.mxu0 0.0
        %1159 = vmatprep.subr.mxu0 0.0
        %1160 = vmatpush2.xpose.msra.mxu0 0.0
        %1161 = vmatprep.subr.mxu0 0.0
        %1162 = vmatpush2.xpose.msra.mxu0 0.0
        %1163 = vmatprep.subr.mxu0 0.0
        %1164 = vmatpush2.xpose.msra.mxu0 0.0
        %1165 = vmatprep.subr.mxu0 0.0
        %1166 = vmatpush2.xpose.msra.mxu0 0.0
        %1167 = vmatprep.subr.mxu0 0.0
        %1168 = vmatpush2.xpose.msra.mxu0 0.0
        %1169 = vmatprep.subr.mxu0 0.0
        %1170 = vmatpush2.xpose.msra.mxu0 0.0
        %1171 = vmatprep.subr.mxu0 0.0
        %1172 = vmatpush2.xpose.msra.mxu0 0.0
        %1173 = vmatprep.subr.mxu0 0.0
        %1174 = vmatpush2.xpose.msra.mxu0 0.0
        %1175 = vmatprep.subr.mxu0 0.0
        %1176 = vmatpush2.xpose.msra.mxu0 0.0
        %1177 = vmatprep.subr.mxu0 0.0
        %1178 = vmatpush2.xpose.msra.mxu0 0.0
        %1179 = vmatprep.subr.mxu0 0.0
        %1180 = vmatpush2.xpose.msra.mxu0 0.0
        %1181 = vmatprep.subr.mxu0 0.0
        %1182 = vmatpush2.xpose.msra.mxu0 0.0
        %1183 = vmatprep.mubr.f32.mxu0 0.0
        %1184 = vmatmul.mubr.f32.gmra.mxu0 %v1114
        %v1185 = vpop.f32.mrf.mxu0
        %v1186 = vadd.f32 0.0, %v1185
        %v1187 = vpop.f32.mrf.mxu0
        %1188 = vdwg.mxu0
        %v1190 = vsel %vm960, %v663, 0
        %v1193 = vsel %vm960, %v811, 0
        %1195 = vmatprep.subr.mxu0 0.0
        %1196 = vmatpush1.xpose.msra.mxu0 0.0
        %1197 = vmatprep.subr.mxu0 0.0
        %1198 = vmatpush1.xpose.msra.mxu0 0.0
        %1199 = vmatprep.subr.mxu0 0.0
        %1200 = vmatpush1.xpose.msra.mxu0 0.0
        %1201 = vmatprep.subr.mxu0 0.0
        %1202 = vmatpush1.xpose.msra.mxu0 0.0
        %1203 = vmatprep.subr.mxu0 0.0
        %1204 = vmatpush1.xpose.msra.mxu0 0.0
        %1205 = vmatprep.subr.mxu0 0.0
        %1206 = vmatpush1.xpose.msra.mxu0 0.0
        %1207 = vmatprep.subr.mxu0 0.0
        %1208 = vmatpush1.xpose.msra.mxu0 0.0
        %1209 = vmatprep.subr.mxu0 0.0
        %1210 = vmatpush1.xpose.msra.mxu0 0.0
        %1211 = vmatprep.subr.mxu0 0.0
        %1212 = vmatpush1.xpose.msra.mxu0 0.0
        %1213 = vmatprep.subr.mxu0 0.0
        %1214 = vmatpush1.xpose.msra.mxu0 0.0
        %1215 = vmatprep.subr.mxu0 0.0
        %1216 = vmatpush1.xpose.msra.mxu0 0.0
        %1217 = vmatprep.subr.mxu0 0.0
        %1218 = vmatpush1.xpose.msra.mxu0 0.0
        %1219 = vmatprep.subr.mxu0 0.0
        %1220 = vmatpush1.xpose.msra.mxu0 0.0
        %1221 = vmatprep.subr.mxu0 0.0
        %1222 = vmatpush1.xpose.msra.mxu0 0.0
        %1223 = vmatprep.subr.mxu0 0.0
        %1224 = vmatpush1.xpose.msra.mxu0 0.0
        %1225 = vmatprep.subr.mxu0 0.0
        %1226 = vmatpush1.xpose.msra.mxu0 %v1193
        %1227 = vmatprep.subr.mxu0 0.0
        %1228 = vmatpush2.xpose.msra.mxu0 0.0
        %1229 = vmatprep.subr.mxu0 0.0
        %1230 = vmatpush2.xpose.msra.mxu0 0.0
        %1231 = vmatprep.subr.mxu0 0.0
        %1232 = vmatpush2.xpose.msra.mxu0 0.0
        %1233 = vmatprep.subr.mxu0 0.0
        %1234 = vmatpush2.xpose.msra.mxu0 0.0
        %1235 = vmatprep.subr.mxu0 0.0
        %1236 = vmatpush2.xpose.msra.mxu0 0.0
        %1237 = vmatprep.subr.mxu0 0.0
        %1238 = vmatpush2.xpose.msra.mxu0 0.0
        %1239 = vmatprep.subr.mxu0 0.0
        %1240 = vmatpush2.xpose.msra.mxu0 0.0
        %1241 = vmatprep.subr.mxu0 0.0
        %1242 = vmatpush2.xpose.msra.mxu0 0.0
        %1243 = vmatprep.subr.mxu0 0.0
        %1244 = vmatpush2.xpose.msra.mxu0 0.0
        %1245 = vmatprep.subr.mxu0 0.0
        %1246 = vmatpush2.xpose.msra.mxu0 0.0
        %1247 = vmatprep.subr.mxu0 0.0
        %1248 = vmatpush2.xpose.msra.mxu0 0.0
        %1249 = vmatprep.subr.mxu0 0.0
        %1250 = vmatpush2.xpose.msra.mxu0 0.0
        %1251 = vmatprep.subr.mxu0 0.0
        %1252 = vmatpush2.xpose.msra.mxu0 0.0
        %1253 = vmatprep.subr.mxu0 0.0
        %1254 = vmatpush2.xpose.msra.mxu0 0.0
        %1255 = vmatprep.subr.mxu0 0.0
        %1256 = vmatpush2.xpose.msra.mxu0 0.0
        %1257 = vmatprep.subr.mxu0 0.0
        %1258 = vmatpush2.xpose.msra.mxu0 0.0
        %1259 = vmatprep.mubr.f32.mxu0 0.0
        %1260 = vmatmul.mubr.f32.gmra.mxu0 %v1190
        %v1261 = vpop.f32.mrf.mxu0
        %v1262 = vadd.f32 0.0, %v1261
        %v1263 = vpop.f32.mrf.mxu0
        %1264 = vdwg.mxu0
        %v1265 = vlaneseq
        %v1266 = vshrl.u32 %v1265, 7
        %v1267 = vlaneseq
        %v1268 = vand.u32 %v1267, 127
        %vm1269 = vcmp.le.s32.totalorder %v1268, %v1266
        %v1270 = vsel %vm1269, 1, 0
        %vm1271 = vcmp.eq.s32.totalorder %v1270, 1
        %v1272 = vsel %vm1271, %v1034, -1e+30
        %v1273 = vsel %vm1271, %v1110, -1e+30
        %v1274 = vsel %vm1271, %v1186, -1e+30
        %v1275 = vsel %vm1271, %v1262, -1e+30
        %v1276 = vsel %vm960, %v1272, -inf
        %1277 = vmax.xlane.f32.xlu0 %v1276
        %v1278 = vpop.xlane.xlu0 %1277
        %v1279 = vsel %vm960, %v1273, -inf
        %1280 = vmax.xlane.f32.xlu0 %v1279
        %v1281 = vpop.xlane.xlu0 %1280
        %v1282 = vsel %vm960, %v1274, -inf
        %1283 = vmax.xlane.f32.xlu0 %v1282
        %v1284 = vpop.xlane.xlu0 %1283
        %v1285 = vsel %vm960, %v1275, -inf
        %1286 = vmax.xlane.f32.xlu0 %v1285
        %v1287 = vpop.xlane.xlu0 %1286
        %v1288 = vsub.f32 %v1272, %v1278
        %v1289 = vsub.f32 %v1273, %v1281
        %v1290 = vsub.f32 %v1274, %v1284
        %v1291 = vsub.f32 %v1275, %v1287
        %v1292 = vmul.f32 %v1288, 1.442695
        %v1293 = vpow.pop %v1292
        %v1294 = vmul.f32 %v1289, 1.442695
        %v1295 = vpow.pop %v1294
        %v1296 = vmul.f32 %v1290, 1.442695
        %v1297 = vpow.pop %v1296
        %v1298 = vmul.f32 %v1291, 1.442695
        %v1299 = vpow.pop %v1298
        %v1300 = vsel %vm960, %v1293, 0.0
        %1301 = vadd.xlane.f32.xlu0 %v1300
        %v1302 = vpop.xlane.xlu0 %1301
        %v1303 = vsel %vm960, %v1295, 0.0
        %1304 = vadd.xlane.f32.xlu0 %v1303
        %v1305 = vpop.xlane.xlu0 %1304
        %v1306 = vsel %vm960, %v1297, 0.0
        %1307 = vadd.xlane.f32.xlu0 %v1306
        %v1308 = vpop.xlane.xlu0 %1307
        %v1309 = vsel %vm960, %v1299, 0.0
        %1310 = vadd.xlane.f32.xlu0 %v1309
        %v1311 = vpop.xlane.xlu0 %1310
        %v1312 = vrcp.pop %v1302
        %v1313 = vrcp.pop %v1305
        %v1314 = vrcp.pop %v1308
        %v1315 = vrcp.pop %v1311
        %v1316 = vmul.f32 %v1293, %v1312
        %v1317 = vmul.f32 %v1295, %v1313
        %v1318 = vmul.f32 %v1297, %v1314
        %v1319 = vmul.f32 %v1299, %v1315
        %v1321 = vsel %vm960, %v1316, 0
        %1323 = vmatprep.subr.mxu0 0.0
        %1324 = vmatpush1.msra.mxu0 0.0
        %1325 = vmatprep.subr.mxu0 0.0
        %1326 = vmatpush1.msra.mxu0 0.0
        %1327 = vmatprep.subr.mxu0 0.0
        %1328 = vmatpush1.msra.mxu0 0.0
        %1329 = vmatprep.subr.mxu0 0.0
        %1330 = vmatpush1.msra.mxu0 0.0
        %1331 = vmatprep.subr.mxu0 0.0
        %1332 = vmatpush1.msra.mxu0 0.0
        %1333 = vmatprep.subr.mxu0 0.0
        %1334 = vmatpush1.msra.mxu0 0.0
        %1335 = vmatprep.subr.mxu0 0.0
        %1336 = vmatpush1.msra.mxu0 0.0
        %1337 = vmatprep.subr.mxu0 0.0
        %1338 = vmatpush1.msra.mxu0 0.0
        %1339 = vmatprep.subr.mxu0 0.0
        %1340 = vmatpush1.msra.mxu0 0.0
        %1341 = vmatprep.subr.mxu0 0.0
        %1342 = vmatpush1.msra.mxu0 0.0
        %1343 = vmatprep.subr.mxu0 0.0
        %1344 = vmatpush1.msra.mxu0 0.0
        %1345 = vmatprep.subr.mxu0 0.0
        %1346 = vmatpush1.msra.mxu0 0.0
        %1347 = vmatprep.subr.mxu0 0.0
        %1348 = vmatpush1.msra.mxu0 0.0
        %1349 = vmatprep.subr.mxu0 0.0
        %1350 = vmatpush1.msra.mxu0 0.0
        %1351 = vmatprep.subr.mxu0 0.0
        %1352 = vmatpush1.msra.mxu0 0.0
        %1353 = vmatprep.subr.mxu0 0.0
        %1354 = vmatpush1.msra.mxu0 %v956
        %1355 = vmatprep.subr.mxu0 0.0
        %1356 = vmatpush2.msra.mxu0 0.0
        %1357 = vmatprep.subr.mxu0 0.0
        %1358 = vmatpush2.msra.mxu0 0.0
        %1359 = vmatprep.subr.mxu0 0.0
        %1360 = vmatpush2.msra.mxu0 0.0
        %1361 = vmatprep.subr.mxu0 0.0
        %1362 = vmatpush2.msra.mxu0 0.0
        %1363 = vmatprep.subr.mxu0 0.0
        %1364 = vmatpush2.msra.mxu0 0.0
        %1365 = vmatprep.subr.mxu0 0.0
        %1366 = vmatpush2.msra.mxu0 0.0
        %1367 = vmatprep.subr.mxu0 0.0
        %1368 = vmatpush2.msra.mxu0 0.0
        %1369 = vmatprep.subr.mxu0 0.0
        %1370 = vmatpush2.msra.mxu0 0.0
        %1371 = vmatprep.subr.mxu0 0.0
        %1372 = vmatpush2.msra.mxu0 0.0
        %1373 = vmatprep.subr.mxu0 0.0
        %1374 = vmatpush2.msra.mxu0 0.0
        %1375 = vmatprep.subr.mxu0 0.0
        %1376 = vmatpush2.msra.mxu0 0.0
        %1377 = vmatprep.subr.mxu0 0.0
        %1378 = vmatpush2.msra.mxu0 0.0
        %1379 = vmatprep.subr.mxu0 0.0
        %1380 = vmatpush2.msra.mxu0 0.0
        %1381 = vmatprep.subr.mxu0 0.0
        %1382 = vmatpush2.msra.mxu0 0.0
        %1383 = vmatprep.subr.mxu0 0.0
        %1384 = vmatpush2.msra.mxu0 0.0
        %1385 = vmatprep.subr.mxu0 0.0
        %1386 = vmatpush2.msra.mxu0 0.0
        %1387 = vmatprep.mubr.f32.mxu0 0.0
        %1388 = vmatmul.mubr.f32.gmra.mxu0 %v1321
        %v1389 = vpop.f32.mrf.mxu0
        %v1390 = vadd.f32 0.0, %v1389
        %v1391 = vpop.f32.mrf.mxu0
        %1392 = vdwg.mxu0
        %v1394 = vsel %vm960, %v1317, 0
        %1396 = vmatprep.subr.mxu0 0.0
        %1397 = vmatpush1.msra.mxu0 0.0
        %1398 = vmatprep.subr.mxu0 0.0
        %1399 = vmatpush1.msra.mxu0 0.0
        %1400 = vmatprep.subr.mxu0 0.0
        %1401 = vmatpush1.msra.mxu0 0.0
        %1402 = vmatprep.subr.mxu0 0.0
        %1403 = vmatpush1.msra.mxu0 0.0
        %1404 = vmatprep.subr.mxu0 0.0
        %1405 = vmatpush1.msra.mxu0 0.0
        %1406 = vmatprep.subr.mxu0 0.0
        %1407 = vmatpush1.msra.mxu0 0.0
        %1408 = vmatprep.subr.mxu0 0.0
        %1409 = vmatpush1.msra.mxu0 0.0
        %1410 = vmatprep.subr.mxu0 0.0
        %1411 = vmatpush1.msra.mxu0 0.0
        %1412 = vmatprep.subr.mxu0 0.0
        %1413 = vmatpush1.msra.mxu0 0.0
        %1414 = vmatprep.subr.mxu0 0.0
        %1415 = vmatpush1.msra.mxu0 0.0
        %1416 = vmatprep.subr.mxu0 0.0
        %1417 = vmatpush1.msra.mxu0 0.0
        %1418 = vmatprep.subr.mxu0 0.0
        %1419 = vmatpush1.msra.mxu0 0.0
        %1420 = vmatprep.subr.mxu0 0.0
        %1421 = vmatpush1.msra.mxu0 0.0
        %1422 = vmatprep.subr.mxu0 0.0
        %1423 = vmatpush1.msra.mxu0 0.0
        %1424 = vmatprep.subr.mxu0 0.0
        %1425 = vmatpush1.msra.mxu0 0.0
        %1426 = vmatprep.subr.mxu0 0.0
        %1427 = vmatpush1.msra.mxu0 %v957
        %1428 = vmatprep.subr.mxu0 0.0
        %1429 = vmatpush2.msra.mxu0 0.0
        %1430 = vmatprep.subr.mxu0 0.0
        %1431 = vmatpush2.msra.mxu0 0.0
        %1432 = vmatprep.subr.mxu0 0.0
        %1433 = vmatpush2.msra.mxu0 0.0
        %1434 = vmatprep.subr.mxu0 0.0
        %1435 = vmatpush2.msra.mxu0 0.0
        %1436 = vmatprep.subr.mxu0 0.0
        %1437 = vmatpush2.msra.mxu0 0.0
        %1438 = vmatprep.subr.mxu0 0.0
        %1439 = vmatpush2.msra.mxu0 0.0
        %1440 = vmatprep.subr.mxu0 0.0
        %1441 = vmatpush2.msra.mxu0 0.0
        %1442 = vmatprep.subr.mxu0 0.0
        %1443 = vmatpush2.msra.mxu0 0.0
        %1444 = vmatprep.subr.mxu0 0.0
        %1445 = vmatpush2.msra.mxu0 0.0
        %1446 = vmatprep.subr.mxu0 0.0
        %1447 = vmatpush2.msra.mxu0 0.0
        %1448 = vmatprep.subr.mxu0 0.0
        %1449 = vmatpush2.msra.mxu0 0.0
        %1450 = vmatprep.subr.mxu0 0.0
        %1451 = vmatpush2.msra.mxu0 0.0
        %1452 = vmatprep.subr.mxu0 0.0
        %1453 = vmatpush2.msra.mxu0 0.0
        %1454 = vmatprep.subr.mxu0 0.0
        %1455 = vmatpush2.msra.mxu0 0.0
        %1456 = vmatprep.subr.mxu0 0.0
        %1457 = vmatpush2.msra.mxu0 0.0
        %1458 = vmatprep.subr.mxu0 0.0
        %1459 = vmatpush2.msra.mxu0 0.0
        %1460 = vmatprep.mubr.f32.mxu0 0.0
        %1461 = vmatmul.mubr.f32.gmra.mxu0 %v1394
        %v1462 = vpop.f32.mrf.mxu0
        %v1463 = vadd.f32 0.0, %v1462
        %v1464 = vpop.f32.mrf.mxu0
        %1465 = vdwg.mxu0
        %v1467 = vsel %vm960, %v1318, 0
        %1469 = vmatprep.subr.mxu0 0.0
        %1470 = vmatpush1.msra.mxu0 0.0
        %1471 = vmatprep.subr.mxu0 0.0
        %1472 = vmatpush1.msra.mxu0 0.0
        %1473 = vmatprep.subr.mxu0 0.0
        %1474 = vmatpush1.msra.mxu0 0.0
        %1475 = vmatprep.subr.mxu0 0.0
        %1476 = vmatpush1.msra.mxu0 0.0
        %1477 = vmatprep.subr.mxu0 0.0
        %1478 = vmatpush1.msra.mxu0 0.0
        %1479 = vmatprep.subr.mxu0 0.0
        %1480 = vmatpush1.msra.mxu0 0.0
        %1481 = vmatprep.subr.mxu0 0.0
        %1482 = vmatpush1.msra.mxu0 0.0
        %1483 = vmatprep.subr.mxu0 0.0
        %1484 = vmatpush1.msra.mxu0 0.0
        %1485 = vmatprep.subr.mxu0 0.0
        %1486 = vmatpush1.msra.mxu0 0.0
        %1487 = vmatprep.subr.mxu0 0.0
        %1488 = vmatpush1.msra.mxu0 0.0
        %1489 = vmatprep.subr.mxu0 0.0
        %1490 = vmatpush1.msra.mxu0 0.0
        %1491 = vmatprep.subr.mxu0 0.0
        %1492 = vmatpush1.msra.mxu0 0.0
        %1493 = vmatprep.subr.mxu0 0.0
        %1494 = vmatpush1.msra.mxu0 0.0
        %1495 = vmatprep.subr.mxu0 0.0
        %1496 = vmatpush1.msra.mxu0 0.0
        %1497 = vmatprep.subr.mxu0 0.0
        %1498 = vmatpush1.msra.mxu0 0.0
        %1499 = vmatprep.subr.mxu0 0.0
        %1500 = vmatpush1.msra.mxu0 %v958
        %1501 = vmatprep.subr.mxu0 0.0
        %1502 = vmatpush2.msra.mxu0 0.0
        %1503 = vmatprep.subr.mxu0 0.0
        %1504 = vmatpush2.msra.mxu0 0.0
        %1505 = vmatprep.subr.mxu0 0.0
        %1506 = vmatpush2.msra.mxu0 0.0
        %1507 = vmatprep.subr.mxu0 0.0
        %1508 = vmatpush2.msra.mxu0 0.0
        %1509 = vmatprep.subr.mxu0 0.0
        %1510 = vmatpush2.msra.mxu0 0.0
        %1511 = vmatprep.subr.mxu0 0.0
        %1512 = vmatpush2.msra.mxu0 0.0
        %1513 = vmatprep.subr.mxu0 0.0
        %1514 = vmatpush2.msra.mxu0 0.0
        %1515 = vmatprep.subr.mxu0 0.0
        %1516 = vmatpush2.msra.mxu0 0.0
        %1517 = vmatprep.subr.mxu0 0.0
        %1518 = vmatpush2.msra.mxu0 0.0
        %1519 = vmatprep.subr.mxu0 0.0
        %1520 = vmatpush2.msra.mxu0 0.0
        %1521 = vmatprep.subr.mxu0 0.0
        %1522 = vmatpush2.msra.mxu0 0.0
        %1523 = vmatprep.subr.mxu0 0.0
        %1524 = vmatpush2.msra.mxu0 0.0
        %1525 = vmatprep.subr.mxu0 0.0
        %1526 = vmatpush2.msra.mxu0 0.0
        %1527 = vmatprep.subr.mxu0 0.0
        %1528 = vmatpush2.msra.mxu0 0.0
        %1529 = vmatprep.subr.mxu0 0.0
        %1530 = vmatpush2.msra.mxu0 0.0
        %1531 = vmatprep.subr.mxu0 0.0
        %1532 = vmatpush2.msra.mxu0 0.0
        %1533 = vmatprep.mubr.f32.mxu0 0.0
        %1534 = vmatmul.mubr.f32.gmra.mxu0 %v1467
        %v1535 = vpop.f32.mrf.mxu0
        %v1536 = vadd.f32 0.0, %v1535
        %v1537 = vpop.f32.mrf.mxu0
        %1538 = vdwg.mxu0
        %v1540 = vsel %vm960, %v1319, 0
        %1542 = vmatprep.subr.mxu0 0.0
        %1543 = vmatpush1.msra.mxu0 0.0
        %1544 = vmatprep.subr.mxu0 0.0
        %1545 = vmatpush1.msra.mxu0 0.0
        %1546 = vmatprep.subr.mxu0 0.0
        %1547 = vmatpush1.msra.mxu0 0.0
        %1548 = vmatprep.subr.mxu0 0.0
        %1549 = vmatpush1.msra.mxu0 0.0
        %1550 = vmatprep.subr.mxu0 0.0
        %1551 = vmatpush1.msra.mxu0 0.0
        %1552 = vmatprep.subr.mxu0 0.0
        %1553 = vmatpush1.msra.mxu0 0.0
        %1554 = vmatprep.subr.mxu0 0.0
        %1555 = vmatpush1.msra.mxu0 0.0
        %1556 = vmatprep.subr.mxu0 0.0
        %1557 = vmatpush1.msra.mxu0 0.0
        %1558 = vmatprep.subr.mxu0 0.0
        %1559 = vmatpush1.msra.mxu0 0.0
        %1560 = vmatprep.subr.mxu0 0.0
        %1561 = vmatpush1.msra.mxu0 0.0
        %1562 = vmatprep.subr.mxu0 0.0
        %1563 = vmatpush1.msra.mxu0 0.0
        %1564 = vmatprep.subr.mxu0 0.0
        %1565 = vmatpush1.msra.mxu0 0.0
        %1566 = vmatprep.subr.mxu0 0.0
        %1567 = vmatpush1.msra.mxu0 0.0
        %1568 = vmatprep.subr.mxu0 0.0
        %1569 = vmatpush1.msra.mxu0 0.0
        %1570 = vmatprep.subr.mxu0 0.0
        %1571 = vmatpush1.msra.mxu0 0.0
        %1572 = vmatprep.subr.mxu0 0.0
        %1573 = vmatpush1.msra.mxu0 %v959
        %1574 = vmatprep.subr.mxu0 0.0
        %1575 = vmatpush2.msra.mxu0 0.0
        %1576 = vmatprep.subr.mxu0 0.0
        %1577 = vmatpush2.msra.mxu0 0.0
        %1578 = vmatprep.subr.mxu0 0.0
        %1579 = vmatpush2.msra.mxu0 0.0
        %1580 = vmatprep.subr.mxu0 0.0
        %1581 = vmatpush2.msra.mxu0 0.0
        %1582 = vmatprep.subr.mxu0 0.0
        %1583 = vmatpush2.msra.mxu0 0.0
        %1584 = vmatprep.subr.mxu0 0.0
        %1585 = vmatpush2.msra.mxu0 0.0
        %1586 = vmatprep.subr.mxu0 0.0
        %1587 = vmatpush2.msra.mxu0 0.0
        %1588 = vmatprep.subr.mxu0 0.0
        %1589 = vmatpush2.msra.mxu0 0.0
        %1590 = vmatprep.subr.mxu0 0.0
        %1591 = vmatpush2.msra.mxu0 0.0
        %1592 = vmatprep.subr.mxu0 0.0
        %1593 = vmatpush2.msra.mxu0 0.0
        %1594 = vmatprep.subr.mxu0 0.0
        %1595 = vmatpush2.msra.mxu0 0.0
        %1596 = vmatprep.subr.mxu0 0.0
        %1597 = vmatpush2.msra.mxu0 0.0
        %1598 = vmatprep.subr.mxu0 0.0
        %1599 = vmatpush2.msra.mxu0 0.0
        %1600 = vmatprep.subr.mxu0 0.0
        %1601 = vmatpush2.msra.mxu0 0.0
        %1602 = vmatprep.subr.mxu0 0.0
        %1603 = vmatpush2.msra.mxu0 0.0
        %1604 = vmatprep.subr.mxu0 0.0
        %1605 = vmatpush2.msra.mxu0 0.0
        %1606 = vmatprep.mubr.f32.mxu0 0.0
        %1607 = vmatmul.mubr.f32.gmra.mxu0 %v1540
        %v1608 = vpop.f32.mrf.mxu0
        %v1609 = vadd.f32 0.0, %v1608
        %v1610 = vpop.f32.mrf.mxu0
        %1611 = vdwg.mxu0
        %v1612 = vcombine.low %v1390, %v1536
        %v1613 = vcombine.high %v1390, %v1536
        %v1615 = vunpack.c.l.s4 1983009808
        %v1616 = vunpack.c.0.s8 %v1615
        %v1617 = vlaneseq
        %v1618 = vshrl.u32 %v1617, 7
        %v1619 = vsub.s32 %v1616, %v1618
        %v1620 = vrot.slane %v1612, %v1619
        %v1622 = vunpack.c.l.s4 1983009808
        %v1623 = vunpack.c.0.s8 %v1622
        %v1624 = vlaneseq
        %v1625 = vshrl.u32 %v1624, 7
        %v1626 = vsub.s32 %v1623, %v1625
        %v1627 = vrot.slane %v1613, %v1626
        %v1628 = vcombine.low %v1463, %v1609
        %v1629 = vcombine.high %v1463, %v1609
        %v1631 = vunpack.c.l.s4 1983009808
        %v1632 = vunpack.c.0.s8 %v1631
        %v1633 = vlaneseq
        %v1634 = vshrl.u32 %v1633, 7
        %v1635 = vsub.s32 %v1632, %v1634
        %v1636 = vrot.slane %v1628, %v1635
        %v1638 = vunpack.c.l.s4 1983009808
        %v1639 = vunpack.c.0.s8 %v1638
        %v1640 = vlaneseq
        %v1641 = vshrl.u32 %v1640, 7
        %v1642 = vsub.s32 %v1639, %v1641
        %v1643 = vrot.slane %v1629, %v1642
        %v1644 = vcombine.low %v1620, %v1636
        %v1645 = vcombine.high %v1620, %v1636
        %v1647 = vunpack.c.l.s4 1934713408
        %v1648 = vunpack.c.0.s8 %v1647
        %v1649 = vlaneseq
        %v1650 = vshrl.u32 %v1649, 7
        %v1651 = vsub.s32 %v1648, %v1650
        %v1652 = vrot.slane %v1644, %v1651
        %v1654 = vunpack.c.l.s4 1934713408
        %v1655 = vunpack.c.0.s8 %v1654
        %v1656 = vlaneseq
        %v1657 = vshrl.u32 %v1656, 7
        %v1658 = vsub.s32 %v1655, %v1657
        %v1659 = vrot.slane %v1645, %v1658
        %v1660 = vcombine.low %v1627, %v1643
        %v1661 = vcombine.high %v1627, %v1643
        %v1663 = vunpack.c.l.s4 1934713408
        %v1664 = vunpack.c.0.s8 %v1663
        %v1665 = vlaneseq
        %v1666 = vshrl.u32 %v1665, 7
        %v1667 = vsub.s32 %v1664, %v1666
        %v1668 = vrot.slane %v1660, %v1667
        %v1670 = vunpack.c.l.s4 1934713408
        %v1671 = vunpack.c.0.s8 %v1670
        %v1672 = vlaneseq
        %v1673 = vshrl.u32 %v1672, 7
        %v1674 = vsub.s32 %v1671, %v1673
        %v1675 = vrot.slane %v1661, %v1674
        %v1676 = vcombine.high %v1652, 0.0
        %v1677 = vcombine.high %v1659, 0.0
        %v1678 = vcombine.high %v1668, 0.0
        %v1679 = vcombine.high %v1675, 0.0
        %v1680 = vcombine.low %v1652, %v1659
        %v1682 = vunpack.c.l.s4 1983009808
        %v1683 = vunpack.c.0.s8 %v1682
        %v1684 = vlaneseq
        %v1685 = vshrl.u32 %v1684, 7
        %v1686 = vsub.s32 %v1683, %v1685
        %v1687 = vrot.slane %v1680, %v1686
        %v1688 = vcombine.low %v1676, %v1677
        %v1690 = vunpack.c.l.s4 1983009808
        %v1691 = vunpack.c.0.s8 %v1690
        %v1692 = vlaneseq
        %v1693 = vshrl.u32 %v1692, 7
        %v1694 = vsub.s32 %v1691, %v1693
        %v1695 = vrot.slane %v1688, %v1694
        %v1696 = vcombine.low %v1668, %v1675
        %v1698 = vunpack.c.l.s4 1983009808
        %v1699 = vunpack.c.0.s8 %v1698
        %v1700 = vlaneseq
        %v1701 = vshrl.u32 %v1700, 7
        %v1702 = vsub.s32 %v1699, %v1701
        %v1703 = vrot.slane %v1696, %v1702
        %v1704 = vcombine.low %v1678, %v1679
        %v1706 = vunpack.c.l.s4 1983009808
        %v1707 = vunpack.c.0.s8 %v1706
        %v1708 = vlaneseq
        %v1709 = vshrl.u32 %v1708, 7
        %v1710 = vsub.s32 %v1707, %v1709
        %v1711 = vrot.slane %v1704, %v1710
        %v1712 = vcombine.low %v1687, %v1695
        %v1713 = vcombine.high %v1687, %v1695
        %v1715 = vunpack.c.l.s4 1934713408
        %v1716 = vunpack.c.0.s8 %v1715
        %v1717 = vlaneseq
        %v1718 = vshrl.u32 %v1717, 7
        %v1719 = vsub.s32 %v1716, %v1718
        %v1720 = vrot.slane %v1712, %v1719
        %v1722 = vunpack.c.l.s4 1934713408
        %v1723 = vunpack.c.0.s8 %v1722
        %v1724 = vlaneseq
        %v1725 = vshrl.u32 %v1724, 7
        %v1726 = vsub.s32 %v1723, %v1725
        %v1727 = vrot.slane %v1713, %v1726
        %v1728 = vcombine.low %v1703, %v1711
        %v1729 = vcombine.high %v1703, %v1711
        %v1731 = vunpack.c.l.s4 1934713408
        %v1732 = vunpack.c.0.s8 %v1731
        %v1733 = vlaneseq
        %v1734 = vshrl.u32 %v1733, 7
        %v1735 = vsub.s32 %v1732, %v1734
        %v1736 = vrot.slane %v1728, %v1735
        %v1738 = vunpack.c.l.s4 1934713408
        %v1739 = vunpack.c.0.s8 %v1738
        %v1740 = vlaneseq
        %v1741 = vshrl.u32 %v1740, 7
        %v1742 = vsub.s32 %v1739, %v1741
        %v1743 = vrot.slane %v1729, %v1742
        %v1744 = vcombine.low %v1720, %v1736
        %v1745 = vcombine.high %v1720, %v1736
        %v1746 = vcombine.low %v1727, %v1743
        %v1747 = vcombine.high %v1727, %v1743
        %1749 = vrot.lane.b32.xlu0 %v1745, 8
        %v1750 = vpop.permute.xlu0 %1749
        %1753 = vrot.lane.b32.xlu0 %v1746, 16
        %v1754 = vpop.permute.xlu0 %1753
        %1757 = vrot.lane.b32.xlu0 %v1747, 24
        %v1758 = vpop.permute.xlu0 %1757
        %v1760 = vsel %vm960, %v1744, %v1750
        %vm1761 = vcmask 130048
        %v1762 = vsel %vm1761, %v1760, %v1754
        %vm1763 = vcmask 195584
        %v1764 = vsel %vm1763, %v1762, %v1758
        %v1765 = vld [vmem:[%s4] sm:$0xff]
        %v1766 = vld [vmem:[%s4 + $0x8] sm:$0xff]
        %v1767 = vld [vmem:[%s4 + $0x10] sm:$0xff]
        %v1768 = vld [vmem:[%s4 + $0x18] sm:$0xff]
        %v1769 = vld [vmem:[%s5] sm:$0x1]
        %v1771 = vlaneseq
        %v1772 = vshrl.u32 %v1771, 7
        %v1773 = vsub.s32 0, %v1772
        %v1774 = vrot.slane %v1769, %v1773
        %v1777 = vsel %vm410, %v1764, 0
        %1779 = vmatprep.subr.mxu0 0.0
        %1780 = vmatpush1.msra.mxu0 0.0
        %1781 = vmatprep.subr.mxu0 0.0
        %1782 = vmatpush1.msra.mxu0 0.0
        %1783 = vmatprep.subr.mxu0 0.0
        %1784 = vmatpush1.msra.mxu0 0.0
        %1785 = vmatprep.subr.mxu0 0.0
        %1786 = vmatpush1.msra.mxu0 0.0
        %1787 = vmatprep.subr.mxu0 0.0
        %1788 = vmatpush1.msra.mxu0 0.0
        %1789 = vmatprep.subr.mxu0 0.0
        %1790 = vmatpush1.msra.mxu0 0.0
        %1791 = vmatprep.subr.mxu0 0.0
        %1792 = vmatpush1.msra.mxu0 0.0
        %1793 = vmatprep.subr.mxu0 0.0
        %1794 = vmatpush1.msra.mxu0 0.0
        %1795 = vmatprep.subr.mxu0 0.0
        %1796 = vmatpush1.msra.mxu0 0.0
        %1797 = vmatprep.subr.mxu0 0.0
        %1798 = vmatpush1.msra.mxu0 0.0
        %1799 = vmatprep.subr.mxu0 0.0
        %1800 = vmatpush1.msra.mxu0 0.0
        %1801 = vmatprep.subr.mxu0 0.0
        %1802 = vmatpush1.msra.mxu0 0.0
        %1803 = vmatprep.subr.mxu0 0.0
        %1804 = vmatpush1.msra.mxu0 %v1768
        %1805 = vmatprep.subr.mxu0 0.0
        %1806 = vmatpush1.msra.mxu0 %v1767
        %1807 = vmatprep.subr.mxu0 0.0
        %1808 = vmatpush1.msra.mxu0 %v1766
        %1809 = vmatprep.subr.mxu0 0.0
        %1810 = vmatpush1.msra.mxu0 %v1765
        %1811 = vmatprep.subr.mxu0 0.0
        %1812 = vmatpush2.msra.mxu0 0.0
        %1813 = vmatprep.subr.mxu0 0.0
        %1814 = vmatpush2.msra.mxu0 0.0
        %1815 = vmatprep.subr.mxu0 0.0
        %1816 = vmatpush2.msra.mxu0 0.0
        %1817 = vmatprep.subr.mxu0 0.0
        %1818 = vmatpush2.msra.mxu0 0.0
        %1819 = vmatprep.subr.mxu0 0.0
        %1820 = vmatpush2.msra.mxu0 0.0
        %1821 = vmatprep.subr.mxu0 0.0
        %1822 = vmatpush2.msra.mxu0 0.0
        %1823 = vmatprep.subr.mxu0 0.0
        %1824 = vmatpush2.msra.mxu0 0.0
        %1825 = vmatprep.subr.mxu0 0.0
        %1826 = vmatpush2.msra.mxu0 0.0
        %1827 = vmatprep.subr.mxu0 0.0
        %1828 = vmatpush2.msra.mxu0 0.0
        %1829 = vmatprep.subr.mxu0 0.0
        %1830 = vmatpush2.msra.mxu0 0.0
        %1831 = vmatprep.subr.mxu0 0.0
        %1832 = vmatpush2.msra.mxu0 0.0
        %1833 = vmatprep.subr.mxu0 0.0
        %1834 = vmatpush2.msra.mxu0 0.0
        %1835 = vmatprep.subr.mxu0 0.0
        %1836 = vmatpush2.msra.mxu0 0.0
        %1837 = vmatprep.subr.mxu0 0.0
        %1838 = vmatpush2.msra.mxu0 0.0
        %1839 = vmatprep.subr.mxu0 0.0
        %1840 = vmatpush2.msra.mxu0 0.0
        %1841 = vmatprep.subr.mxu0 0.0
        %1842 = vmatpush2.msra.mxu0 0.0
        %1843 = vmatprep.mubr.f32.mxu0 0.0
        %1844 = vmatmul.mubr.f32.gmra.mxu0 %v1777
        %v1845 = vpop.f32.mrf.mxu0
        %v1846 = vadd.f32 %v1774, %v1845
        %v1847 = vpop.f32.mrf.mxu0
        %1848 = vdwg.mxu0
        %v1849 = vadd.f32 %v409, %v1846
        %v1850 = vsel %vm410, %v1849, 0.0
        %1851 = vadd.xlane.f32.xlu0 %v1850
        %v1852 = vpop.xlane.xlu0 %1851
        %v1853 = vmul.f32 %v1852, %v414
        %v1854 = vsub.f32 %v1849, %v1853
        %v1855 = vmul.f32 %v1854, %v1854
        %v1856 = vsel %vm410, %v1855, 0.0
        %1857 = vadd.xlane.f32.xlu0 %v1856
        %v1858 = vpop.xlane.xlu0 %1857
        %v1859 = vmul.f32 %v1858, %v414
        %v1860 = vadd.f32 %v1859, 1e-05
        %v1861 = vrsqrt.pop %v1860
        %v1862 = vld [vmem:[%s6] sm:$0x1]
        %v1863 = vmul.f32 %v1854, %v1861
        %v1865 = vlaneseq
        %v1866 = vshrl.u32 %v1865, 7
        %v1867 = vsub.s32 0, %v1866
        %v1868 = vrot.slane %v1862, %v1867
        %v1870 = vmul.f32 %v1868, %v1863
        %v1871 = vld [vmem:[%s7] sm:$0x1]
        %v1873 = vlaneseq
        %v1874 = vshrl.u32 %v1873, 7
        %v1875 = vsub.s32 0, %v1874
        %v1876 = vrot.slane %v1871, %v1875
        %v1878 = vadd.f32 %v1870, %v1876
        %v1879 = vld [vmem:[%s8] sm:$0xff]
        %v1880 = vld [vmem:[%s8 + $0x8] sm:$0xff]
        %v1881 = vld [vmem:[%s8 + $0x10] sm:$0xff]
        %v1882 = vld [vmem:[%s8 + $0x18] sm:$0xff]
        %v1883 = vld [vmem:[%s9] sm:$0x1]
        %v1885 = vlaneseq
        %v1886 = vshrl.u32 %v1885, 7
        %v1887 = vsub.s32 0, %v1886
        %v1888 = vrot.slane %v1883, %v1887
        %v1891 = vsel %vm410, %v1878, 0
        %1893 = vmatprep.subr.mxu0 0.0
        %1894 = vmatpush1.msra.mxu0 0.0
        %1895 = vmatprep.subr.mxu0 0.0
        %1896 = vmatpush1.msra.mxu0 0.0
        %1897 = vmatprep.subr.mxu0 0.0
        %1898 = vmatpush1.msra.mxu0 0.0
        %1899 = vmatprep.subr.mxu0 0.0
        %1900 = vmatpush1.msra.mxu0 0.0
        %1901 = vmatprep.subr.mxu0 0.0
        %1902 = vmatpush1.msra.mxu0 0.0
        %1903 = vmatprep.subr.mxu0 0.0
        %1904 = vmatpush1.msra.mxu0 0.0
        %1905 = vmatprep.subr.mxu0 0.0
        %1906 = vmatpush1.msra.mxu0 0.0
        %1907 = vmatprep.subr.mxu0 0.0
        %1908 = vmatpush1.msra.mxu0 0.0
        %1909 = vmatprep.subr.mxu0 0.0
        %1910 = vmatpush1.msra.mxu0 0.0
        %1911 = vmatprep.subr.mxu0 0.0
        %1912 = vmatpush1.msra.mxu0 0.0
        %1913 = vmatprep.subr.mxu0 0.0
        %1914 = vmatpush1.msra.mxu0 0.0
        %1915 = vmatprep.subr.mxu0 0.0
        %1916 = vmatpush1.msra.mxu0 0.0
        %1917 = vmatprep.subr.mxu0 0.0
        %1918 = vmatpush1.msra.mxu0 %v1882
        %1919 = vmatprep.subr.mxu0 0.0
        %1920 = vmatpush1.msra.mxu0 %v1881
        %1921 = vmatprep.subr.mxu0 0.0
        %1922 = vmatpush1.msra.mxu0 %v1880
        %1923 = vmatprep.subr.mxu0 0.0
        %1924 = vmatpush1.msra.mxu0 %v1879
        %1925 = vmatprep.subr.mxu0 0.0
        %1926 = vmatpush2.msra.mxu0 0.0
        %1927 = vmatprep.subr.mxu0 0.0
        %1928 = vmatpush2.msra.mxu0 0.0
        %1929 = vmatprep.subr.mxu0 0.0
        %1930 = vmatpush2.msra.mxu0 0.0
        %1931 = vmatprep.subr.mxu0 0.0
        %1932 = vmatpush2.msra.mxu0 0.0
        %1933 = vmatprep.subr.mxu0 0.0
        %1934 = vmatpush2.msra.mxu0 0.0
        %1935 = vmatprep.subr.mxu0 0.0
        %1936 = vmatpush2.msra.mxu0 0.0
        %1937 = vmatprep.subr.mxu0 0.0
        %1938 = vmatpush2.msra.mxu0 0.0
        %1939 = vmatprep.subr.mxu0 0.0
        %1940 = vmatpush2.msra.mxu0 0.0
        %1941 = vmatprep.subr.mxu0 0.0
        %1942 = vmatpush2.msra.mxu0 0.0
        %1943 = vmatprep.subr.mxu0 0.0
        %1944 = vmatpush2.msra.mxu0 0.0
        %1945 = vmatprep.subr.mxu0 0.0
        %1946 = vmatpush2.msra.mxu0 0.0
        %1947 = vmatprep.subr.mxu0 0.0
        %1948 = vmatpush2.msra.mxu0 0.0
        %1949 = vmatprep.subr.mxu0 0.0
        %1950 = vmatpush2.msra.mxu0 0.0
        %1951 = vmatprep.subr.mxu0 0.0
        %1952 = vmatpush2.msra.mxu0 0.0
        %1953 = vmatprep.subr.mxu0 0.0
        %1954 = vmatpush2.msra.mxu0 0.0
        %1955 = vmatprep.subr.mxu0 0.0
        %1956 = vmatpush2.msra.mxu0 0.0
        %1957 = vmatprep.mubr.f32.mxu0 0.0
        %1958 = vmatmul.mubr.f32.gmra.mxu0 %v1891
        %v1959 = vpop.f32.mrf.mxu0
        %v1960 = vadd.f32 %v1888, %v1959
        %v1961 = vpop.f32.mrf.mxu0
        %1962 = vdwg.mxu0
        %v1963 = vmul.f32 %v1960, 0.5
        %v1964 = vmul.f32 %v1960, 0.044715
        %v1965 = vmul.f32 %v1964, %v1960
        %v1966 = vmul.f32 %v1965, %v1960
        %v1967 = vadd.f32 %v1960, %v1966
        %v1968 = vmul.f32 %v1967, 0.7978846
        %v1969 = vtanh.pop %v1968
        %v1970 = vadd.f32 %v1969, 1.0
        %v1971 = vmul.f32 %v1963, %v1970
        %v1972 = vld [vmem:[%s10] sm:$0xff]
        %v1973 = vld [vmem:[%s10 + $0x8] sm:$0xff]
        %v1974 = vld [vmem:[%s10 + $0x10] sm:$0xff]
        %v1975 = vld [vmem:[%s10 + $0x18] sm:$0xff]
        %v1976 = vld [vmem:[%s10 + $0x20] sm:$0xff]
        %v1977 = vld [vmem:[%s10 + $0x28] sm:$0xff]
        %v1978 = vld [vmem:[%s10 + $0x30] sm:$0xff]
        %v1979 = vld [vmem:[%s10 + $0x38] sm:$0xff]
        %v1980 = vld [vmem:[%s10 + $0x40] sm:$0xff]
        %v1981 = vld [vmem:[%s10 + $0x48] sm:$0xff]
        %v1982 = vld [vmem:[%s10 + $0x50] sm:$0xff]
        %v1983 = vld [vmem:[%s10 + $0x58] sm:$0xff]
        %v1984 = vld [vmem:[%s10 + $0x60] sm:$0xff]
        %v1985 = vld [vmem:[%s10 + $0x68] sm:$0xff]
        %v1986 = vld [vmem:[%s10 + $0x70] sm:$0xff]
        %v1987 = vld [vmem:[%s10 + $0x78] sm:$0xff]
        %v1988 = vld [vmem:[%s11] sm:$0x1]
        %v1990 = vlaneseq
        %v1991 = vshrl.u32 %v1990, 7
        %v1992 = vsub.s32 0, %v1991
        %v1993 = vrot.slane %v1988, %v1992
        %1995 = vmatprep.subr.mxu0 0.0
        %1996 = vmatpush1.msra.mxu0 %v1987
        %1997 = vmatprep.subr.mxu0 0.0
        %1998 = vmatpush1.msra.mxu0 %v1986
        %1999 = vmatprep.subr.mxu0 0.0
        %2000 = vmatpush1.msra.mxu0 %v1985
        %2001 = vmatprep.subr.mxu0 0.0
        %2002 = vmatpush1.msra.mxu0 %v1984
        %2003 = vmatprep.subr.mxu0 0.0
        %2004 = vmatpush1.msra.mxu0 %v1983
        %2005 = vmatprep.subr.mxu0 0.0
        %2006 = vmatpush1.msra.mxu0 %v1982
        %2007 = vmatprep.subr.mxu0 0.0
        %2008 = vmatpush1.msra.mxu0 %v1981
        %2009 = vmatprep.subr.mxu0 0.0
        %2010 = vmatpush1.msra.mxu0 %v1980
        %2011 = vmatprep.subr.mxu0 0.0
        %2012 = vmatpush1.msra.mxu0 %v1979
        %2013 = vmatprep.subr.mxu0 0.0
        %2014 = vmatpush1.msra.mxu0 %v1978
        %2015 = vmatprep.subr.mxu0 0.0
        %2016 = vmatpush1.msra.mxu0 %v1977
        %2017 = vmatprep.subr.mxu0 0.0
        %2018 = vmatpush1.msra.mxu0 %v1976
        %2019 = vmatprep.subr.mxu0 0.0
        %2020 = vmatpush1.msra.mxu0 %v1975
        %2021 = vmatprep.subr.mxu0 0.0
        %2022 = vmatpush1.msra.mxu0 %v1974
        %2023 = vmatprep.subr.mxu0 0.0
        %2024 = vmatpush1.msra.mxu0 %v1973
        %2025 = vmatprep.subr.mxu0 0.0
        %2026 = vmatpush1.msra.mxu0 %v1972
        %2027 = vmatprep.subr.mxu0 0.0
        %2028 = vmatpush2.msra.mxu0 0.0
        %2029 = vmatprep.subr.mxu0 0.0
        %2030 = vmatpush2.msra.mxu0 0.0
        %2031 = vmatprep.subr.mxu0 0.0
        %2032 = vmatpush2.msra.mxu0 0.0
        %2033 = vmatprep.subr.mxu0 0.0
        %2034 = vmatpush2.msra.mxu0 0.0
        %2035 = vmatprep.subr.mxu0 0.0
        %2036 = vmatpush2.msra.mxu0 0.0
        %2037 = vmatprep.subr.mxu0 0.0
        %2038 = vmatpush2.msra.mxu0 0.0
        %2039 = vmatprep.subr.mxu0 0.0
        %2040 = vmatpush2.msra.mxu0 0.0
        %2041 = vmatprep.subr.mxu0 0.0
        %2042 = vmatpush2.msra.mxu0 0.0
        %2043 = vmatprep.subr.mxu0 0.0
        %2044 = vmatpush2.msra.mxu0 0.0
        %2045 = vmatprep.subr.mxu0 0.0
        %2046 = vmatpush2.msra.mxu0 0.0
        %2047 = vmatprep.subr.mxu0 0.0
        %2048 = vmatpush2.msra.mxu0 0.0
        %2049 = vmatprep.subr.mxu0 0.0
        %2050 = vmatpush2.msra.mxu0 0.0
        %2051 = vmatprep.subr.mxu0 0.0
        %2052 = vmatpush2.msra.mxu0 0.0
        %2053 = vmatprep.subr.mxu0 0.0
        %2054 = vmatpush2.msra.mxu0 0.0
        %2055 = vmatprep.subr.mxu0 0.0
        %2056 = vmatpush2.msra.mxu0 0.0
        %2057 = vmatprep.subr.mxu0 0.0
        %2058 = vmatpush2.msra.mxu0 0.0
        %2059 = vmatprep.mubr.f32.mxu0 0.0
        %2060 = vmatmul.mubr.f32.gmra.mxu0 %v1971
        %v2061 = vpop.f32.mrf.mxu0
        %v2062 = vadd.f32 %v1993, %v2061
        %v2063 = vpop.f32.mrf.mxu0
        %2064 = vdwg.mxu0
        %v2065 = vadd.f32 %v1849, %v2062
        %2066 = vst.msk [vmem:[%s404] sm:$0xff] %vm410, %v2065
        %s2067 = sand.u32 %s291, 1
        %s2068 = scalar_lea.sflag [#allocation3], %s2067
        %s2069 = sand.u32 %s291, 1
        %s2070 = smul.addr %s2069, 8
        %s2071 = scalar_lea.vmem [#allocation2], %s2070
        // Predicated region
        $region69: #{tpu_custom_call.1} parent=67 // pred_check
          %p2072 = pneg %p301
        $region70: #{tpu_custom_call.1} parent=67 // pred_check_branch
          %2074 = sbr.rel (%p2072) target = $region72
        $region71: #{tpu_custom_call.1} parent=67 // pred_region
          %s2076 = ssub.s32 128, 128
          %2077 = vsyncadd %s2068, %s2076
          %s2078 = smul.addr %s26, 128
          %s2079 = scalar_lea.hbm %s12, %s2078
          %s2081 = sshll.u32 %s2071, 4
          %s2082 = int_to_ptr.vmem [resolvable:$true] %s2081
          %2084 = dma.vmem_to_hbm [thread:$0]  %s2082, 128, %s2079, %s2068
        $region72: #{tpu_custom_call.1} parent=67 // pred_fallthru
          _
      $region68: #{tpu_custom_call.1} parent=5 // pred_fallthru
        _
      %p2085 = scmp.le.s32.totalorder 2, %s21
      // Predicated region
      $region73: #{tpu_custom_call.1} parent=5 // pred_check
        %p2086 = pneg %p2085
      $region74: #{tpu_custom_call.1} parent=5 // pred_check_branch
        %2088 = sbr.rel (%p2086) target = $region76
      $region75: #{tpu_custom_call.1} parent=5 // pred_region
        %s2089 = ssub.s32 %s21, 2
        // Predicated region
        $region77: #{tpu_custom_call.1} parent=75 // pred_check
          %p2090 = pneg %p307
        $region78: #{tpu_custom_call.1} parent=75 // pred_check_branch
          %2092 = sbr.rel (%p2090) target = $region80
        $region79: #{tpu_custom_call.1} parent=75 // pred_region
          %s2093 = sand.u32 %s292, 1
          %s2094 = scalar_lea.sflag [#allocation3], %s2093
          %s2095 = sand.u32 %s292, 1
          %s2096 = smul.addr %s2095, 8
          %s2097 = scalar_lea.vmem [#allocation2], %s2096
          %2098 = dma.done %s2094, 128
        $region80: #{tpu_custom_call.1} parent=75 // pred_fallthru
          _
      $region76: #{tpu_custom_call.1} parent=5 // pred_fallthru
        _
    $region6: #{tpu_custom_call.1} parent=1 // loop_footer
      %s25 = sadd.s32 1, %s21
    $region7: #{tpu_custom_call.1} parent=1 // loop_footer_branch
      %20 = sbr.rel target = $region3
    $region8: #{tpu_custom_call.1} parent=1 // loop_exit
      _
    %2099 = vsyncpa [#allocation3], 1
    %s2100 = scalar_lea.sflag [#allocation3], 1
    %2101 = vsyncpa %s2100, 1

</llo_original>
